<compile_context>
chip_gen: v5e
topology: v5e:2x2
jax: 0.10.0
libtpu: 0.0.40
codegen_flags: <defaults>
</compile_context>

<pallas_src>
import numpy as np

import jax
import jax.numpy as jnp
from jax.experimental import pallas as pl
from jax.experimental.pallas import tpu as pltpu


def _gru_cnn_kernel(
    xcat_ref,      # (T*B, 2E)   row t*B+b = [x[t,b] | x[T-1-t,b]]
    wx_ref,        # (2E, 6H1)   gate columns [r_f r_b z_f z_b n_f n_b]
    bgi_ref,       # (1, 6H1)    interleaved b_ih (both directions)
    wh_ref,        # (2H1, 6H1)  block-diagonal hidden weights (fwd rows / bwd rows)
    bgh_ref,       # (1, 6H1)    interleaved b_hh (both directions)
    wconv_ref,     # (2H1, 4H2)  block-diag: fwd rows -> [tap0_f|tap1_f|0|0],
                   #                          bwd rows -> [0|0|tap0_b|tap1_b]
    cb_ref,        # (1, H2)
    lwT_ref,       # (H2, L)
    lb_ref,        # (1, L)
    out_ref,       # (T, L)
    hstep_ref,     # scratch (T*B, 2H1): row t*B+b = h_cat after fused step t
):
    T, _ = out_ref.shape
    TB, two_h1 = hstep_ref.shape
    B = TB // T
    H1 = two_h1 // 2
    H2 = cb_ref.shape[1]

    # ---- Hoisted input projections: one MXU matmul covers every timestep of
    # both directions (bwd half of each x_cat row is already time-reversed).
    gi_all = (jnp.dot(xcat_ref[...], wx_ref[...],
                      preferred_element_type=jnp.float32)
              + bgi_ref[...])                                      # (T*B, 6H1)

    wh = wh_ref[...]
    bgh = bgh_ref[...]

    # ---- Fused, fully unrolled bidirectional GRU recurrence.
    h_cat = jnp.zeros((B, 2 * H1), jnp.float32)                    # [h_f | h_b]
    for t in range(T):
        gi_t = gi_all[t * B:(t + 1) * B, :]                        # (B, 6H1)
        gh = (jnp.dot(h_cat, wh, preferred_element_type=jnp.float32)
              + bgh)                                               # (B, 6H1)
        # r/z gates for both directions in one 4*H1-lane (=128-lane) op.
        rz = jax.nn.sigmoid(gi_t[:, :4 * H1] + gh[:, :4 * H1])     # (B, 4H1)
        r = rz[:, :2 * H1]                                         # [r_f | r_b]
        z = rz[:, 2 * H1:]                                         # [z_f | z_b]
        n = jnp.tanh(gi_t[:, 4 * H1:] + r * gh[:, 4 * H1:])        # [n_f | n_b]
        h_cat = (1.0 - z) * n + z * h_cat
        # Single contiguous full-row store per step; fwd half belongs to time t,
        # bwd half to time T-1-t (realigned for free via the conv weight layout).
        hstep_ref[t * B:(t + 1) * B, :] = h_cat

    # ---- Conv1d(2H1 -> H2, k=2) over the batch axis + max-pool + ReLU:
    # the entire conv is ONE dense matmul with a lane-dense (4H2 = 128 lane)
    # output; the shift/add/max tail is cheap vector work kept in registers.
    p = jnp.dot(hstep_ref[...], wconv_ref[...],
                preferred_element_type=jnp.float32)                # (T*B, 4H2)
    cb = cb_ref[...]
    pooled_rows = []
    for t in range(T):
        # Time-align: fwd contribution from fused step t, bwd from step T-1-t.
        blk = (p[t * B:(t + 1) * B, :2 * H2]
               + p[(T - 1 - t) * B:(T - t) * B, 2 * H2:])          # (B, 2H2)
        c = blk[:B - 1, :H2] + blk[1:, H2:] + cb                   # (B-1, H2)
        # max-then-ReLU (ReLU is monotone) keeps the ReLU one row wide.
        pooled_rows.append(
            jnp.maximum(jnp.max(c, axis=0, keepdims=True), 0.0))   # (1, H2)
    pooled = jnp.concatenate(pooled_rows, axis=0)                  # (T, H2)

    # ---- Final linear layer, single output store.
    out_ref[...] = (jnp.dot(pooled, lwT_ref[...],
                            preferred_element_type=jnp.float32) + lb_ref[...])


def _gru_cnn_forward_impl(x, params):
    """Pallas implementation of GRU_CNN.forward. x: (T, B, E) float32."""
    T, B, E = x.shape
    assert B >= 2, "Conv1d(kernel=2) over the batch axis requires batch >= 2"
    H1 = params["w_hh_f"].shape[1]
    H2 = params["conv_w"].shape[0]
    L = params["lin_w"].shape[0]
    f32 = jnp.float32

    x = x.astype(f32)
    # Row t*B+b of x_cat = [x[t,b] | x[T-1-t,b]] so one matmul yields the input
    # projections each direction needs at fused-loop step t (layout plumbing).
    x_cat = jnp.concatenate([x, jnp.flip(x, axis=0)], axis=-1).reshape(T * B, 2 * E)

    def split3(w):               # (3H1, K) or (3H1,) -> r, z, n chunks
        return w[:H1], w[H1:2 * H1], w[2 * H1:]

    wir_f, wiz_f, win_f = split3(params["w_ih_f"].astype(f32))
    wir_b, wiz_b, win_b = split3(params["w_ih_b"].astype(f32))
    whr_f, whz_f, whn_f = split3(params["w_hh_f"].astype(f32))
    whr_b, whz_b, whn_b = split3(params["w_hh_b"].astype(f32))

    # Gate column layout everywhere: [r_f r_b z_f z_b n_f n_b].
    z_eh = jnp.zeros((E, H1), f32)
    w_x = jnp.concatenate([
        jnp.concatenate([wir_f.T, z_eh, wiz_f.T, z_eh, win_f.T, z_eh], axis=1),
        jnp.concatenate([z_eh, wir_b.T, z_eh, wiz_b.T, z_eh, win_b.T], axis=1),
    ], axis=0)                                                     # (2E, 6H1)
    z_hh = jnp.zeros((H1, H1), f32)
    w_h = jnp.concatenate([
        jnp.concatenate([whr_f.T, z_hh, whz_f.T, z_hh, whn_f.T, z_hh], axis=1),
        jnp.concatenate([z_hh, whr_b.T, z_hh, whz_b.T, z_hh, whn_b.T], axis=1),
    ], axis=0)                                                     # (2H1, 6H1)

    bir_f, biz_f, bin_f = split3(params["b_ih_f"].astype(f32))
    bir_b, biz_b, bin_b = split3(params["b_ih_b"].astype(f32))
    bhr_f, bhz_f, bhn_f = split3(params["b_hh_f"].astype(f32))
    bhr_b, bhz_b, bhn_b = split3(params["b_hh_b"].astype(f32))
    b_gi = jnp.concatenate([bir_f, bir_b, biz_f, biz_b, bin_f, bin_b]).reshape(1, 6 * H1)
    b_gh = jnp.concatenate([bhr_f, bhr_b, bhz_f, bhz_b, bhn_f, bhn_b]).reshape(1, 6 * H1)

    # Conv weight: block-diagonal (2H1, 4H2) so the matmul over the raw
    # per-step [h_f | h_b] slab separates fwd/bwd tap contributions by lane.
    cw = params["conv_w"].astype(f32)                              # (H2, 2H1, 2)
    w_conv_f = jnp.concatenate([cw[:, :H1, 0].T, cw[:, :H1, 1].T], axis=1)   # (H1, 2H2)
    w_conv_b = jnp.concatenate([cw[:, H1:, 0].T, cw[:, H1:, 1].T], axis=1)   # (H1, 2H2)
    z_c = jnp.zeros((H1, 2 * H2), f32)
    w_conv = jnp.concatenate([
        jnp.concatenate([w_conv_f, z_c], axis=1),
        jnp.concatenate([z_c, w_conv_b], axis=1),
    ], axis=0)                                                     # (2H1, 4H2)
    cb = params["conv_b"].reshape(1, H2).astype(f32)
    lwT = params["lin_w"].T.astype(f32)                            # (H2, L)
    lb = params["lin_b"].reshape(1, L).astype(f32)

    args = (x_cat, w_x, b_gi, w_h, b_gh, w_conv, cb, lwT, lb)
    vmem = pl.BlockSpec(memory_space=pltpu.MemorySpace.VMEM)
    return pl.pallas_call(
        _gru_cnn_kernel,
        out_shape=jax.ShapeDtypeStruct((T, L), f32),
        in_specs=[vmem] * len(args),
        out_specs=vmem,
        scratch_shapes=[
            pltpu.VMEM((T * B, 2 * H1), f32),   # per-step [h_f | h_b] slab
        ],
    )(*args)


gru_cnn_forward = jax.jit(_gru_cnn_forward_impl)


def reference_forward(x, p):
    """Pure-JAX mirror of the PyTorch forward (for correctness checking)."""
    T, B, _ = x.shape
    H1 = p["w_hh_f"].shape[1]

    def run_dir(w_ih, w_hh, b_ih, b_hh, reverse):
        h = jnp.zeros((B, H1), jnp.float32)
        out = [None] * T
        order = range(T - 1, -1, -1) if reverse else range(T)
        for t in order:
            gi = x[t] @ w_ih.T + b_ih
            gh = h @ w_hh.T + b_hh
            r = jax.nn.sigmoid(gi[:, :H1] + gh[:, :H1])
            z = jax.nn.sigmoid(gi[:, H1:2 * H1] + gh[:, H1:2 * H1])
            n = jnp.tanh(gi[:, 2 * H1:] + r * gh[:, 2 * H1:])
            h = (1.0 - z) * n + z * h
            out[t] = h
        return jnp.stack(out, 0)

    hf = run_dir(p["w_ih_f"], p["w_hh_f"], p["b_ih_f"], p["b_hh_f"], False)
    hb = run_dir(p["w_ih_b"], p["w_hh_b"], p["b_ih_b"], p["b_hh_b"], True)
    gru_out = jnp.concatenate([hf, hb], axis=-1)        # (T, B, 2H1)

    xp = jnp.transpose(gru_out, (0, 2, 1))              # (T, 2H1, B)
    w, b = p["conv_w"], p["conv_b"]
    conv = (jnp.einsum("tcp,oc->top", xp[:, :, :-1], w[:, :, 0])
            + jnp.einsum("tcp,oc->top", xp[:, :, 1:], w[:, :, 1])
            + b[None, :, None])                         # (T, H2, B-1)
    relu = jnp.maximum(conv, 0.0)
    y = jnp.transpose(relu, (0, 2, 1))                  # (T, B-1, H2)
    m = jnp.max(y, axis=1)                              # (T, H2)
    return m @ p["lin_w"].T + p["lin_b"]


def init_params(key, E, H1, H2, L):
    ks = jax.random.split(key, 12)
    s_gru = 1.0 / np.sqrt(H1)
    s_conv = 1.0 / np.sqrt(2 * H1 * 2)
    s_lin = 1.0 / np.sqrt(H2)

    def u(k, shape, s):
        return jax.random.uniform(k, shape, jnp.float32, -s, s)

    return {
        "w_ih_f": u(ks[0], (3 * H1, E), s_gru),
        "w_hh_f": u(ks[1], (3 * H1, H1), s_gru),
        "b_ih_f": u(ks[2], (3 * H1,), s_gru),
        "b_hh_f": u(ks[3], (3 * H1,), s_gru),
        "w_ih_b": u(ks[4], (3 * H1, E), s_gru),
        "w_hh_b": u(ks[5], (3 * H1, H1), s_gru),
        "b_ih_b": u(ks[6], (3 * H1,), s_gru),
        "b_hh_b": u(ks[7], (3 * H1,), s_gru),
        "conv_w": u(ks[8], (H2, 2 * H1, 2), s_conv),
        "conv_b": u(ks[9], (H2,), s_conv),
        "lin_w": u(ks[10], (L, H2), s_lin),
        "lin_b": u(ks[11], (L,), s_lin),
    }


if __name__ == "__main__":
    # Small shapes consistent with the module: emb_size=16, hidden_1=32,
    # hidden_2=32, label_size=5; x is (seq_len=8, batch=4, emb_size=16).
    # vocab_size / dropout / pt_embed are unused by forward().
    T, B, E = 8, 4, 16
    H1, H2, L = 32, 32, 5

    key = jax.random.PRNGKey(0)
    kx, kp = jax.random.split(key)
    x = jax.random.normal(kx, (T, B, E), jnp.float32)
    params = init_params(kp, E, H1, H2, L)

    out = gru_cnn_forward(x, params)
    out = jax.block_until_ready(out)
    assert out.shape == (T, L)

    ref = reference_forward(x, params)
    if not np.allclose(np.asarray(out), np.asarray(ref), atol=2e-3, rtol=2e-3):
        raise AssertionError("Pallas output does not match JAX reference")

    print("KERNEL_OK")
</pallas_src>

<mosaic_0001>
module attributes {stable_mosaic.version = 11 : i64} {
  func.func @_gru_cnn_kernel(%arg0: memref<32x32xf32, #tpu.memory_space<vmem>>, %arg1: memref<32x192xf32, #tpu.memory_space<vmem>>, %arg2: memref<1x192xf32, #tpu.memory_space<vmem>>, %arg3: memref<64x192xf32, #tpu.memory_space<vmem>>, %arg4: memref<1x192xf32, #tpu.memory_space<vmem>>, %arg5: memref<64x128xf32, #tpu.memory_space<vmem>>, %arg6: memref<1x32xf32, #tpu.memory_space<vmem>>, %arg7: memref<32x5xf32, #tpu.memory_space<vmem>>, %arg8: memref<1x5xf32, #tpu.memory_space<vmem>>, %arg9: memref<8x5xf32, #tpu.memory_space<vmem>>, %arg10: memref<32x64xf32, #tpu.memory_space<vmem>>) attributes {dimension_semantics = [], scalar_prefetch = 0 : i64, scratch_operands = 1 : i64, tpu.core_type = #tpu.core_type<tc>} {
    %c0 = arith.constant 0 : index
    %c0_0 = arith.constant 0 : index
    %0 = vector.load %arg0[%c0, %c0_0] : memref<32x32xf32, #tpu.memory_space<vmem>>, vector<32x32xf32>
    %c0_1 = arith.constant 0 : index
    %c0_2 = arith.constant 0 : index
    %1 = vector.load %arg1[%c0_1, %c0_2] : memref<32x192xf32, #tpu.memory_space<vmem>>, vector<32x192xf32>
    %cst = arith.constant dense<0.000000e+00> : vector<32x192xf32>
    %2 = tpu.matmul %0, %1, %cst {dimension_numbers = #tpu.dot_dimension_numbers<[1], [0], [0], [1], [0, 0, 1, 1], [], []>} : vector<32x32xf32>, vector<32x192xf32>, vector<32x192xf32> -> vector<32x192xf32>
    %c0_3 = arith.constant 0 : index
    %c0_4 = arith.constant 0 : index
    %3 = vector.load %arg2[%c0_3, %c0_4] : memref<1x192xf32, #tpu.memory_space<vmem>>, vector<1x192xf32>
    %4 = vector.broadcast %3 : vector<1x192xf32> to vector<32x192xf32>
    %5 = arith.addf %2, %4 : vector<32x192xf32>
    %c0_5 = arith.constant 0 : index
    %c0_6 = arith.constant 0 : index
    %6 = vector.load %arg3[%c0_5, %c0_6] : memref<64x192xf32, #tpu.memory_space<vmem>>, vector<64x192xf32>
    %c0_7 = arith.constant 0 : index
    %c0_8 = arith.constant 0 : index
    %7 = vector.load %arg4[%c0_7, %c0_8] : memref<1x192xf32, #tpu.memory_space<vmem>>, vector<1x192xf32>
    %cst_9 = arith.constant 0.000000e+00 : f32
    %8 = vector.broadcast %cst_9 : f32 to vector<4x64xf32>
    %9 = vector.extract_strided_slice %5 {offsets = [0, 0], sizes = [4, 192], strides = [1, 1]} : vector<32x192xf32> to vector<4x192xf32>
    %cst_10 = arith.constant dense<0.000000e+00> : vector<4x192xf32>
    %10 = tpu.matmul %8, %6, %cst_10 {dimension_numbers = #tpu.dot_dimension_numbers<[1], [0], [0], [1], [0, 0, 1, 1], [], []>} : vector<4x64xf32>, vector<64x192xf32>, vector<4x192xf32> -> vector<4x192xf32>
    %11 = vector.broadcast %7 : vector<1x192xf32> to vector<4x192xf32>
    %12 = arith.addf %10, %11 : vector<4x192xf32>
    %13 = vector.extract_strided_slice %9 {offsets = [0, 0], sizes = [4, 128], strides = [1, 1]} : vector<4x192xf32> to vector<4x128xf32>
    %14 = vector.extract_strided_slice %12 {offsets = [0, 0], sizes = [4, 128], strides = [1, 1]} : vector<4x192xf32> to vector<4x128xf32>
    %15 = arith.addf %13, %14 : vector<4x128xf32>
    %16 = arith.negf %15 : vector<4x128xf32>
    %17 = math.exp %16 : vector<4x128xf32>
    %cst_11 = arith.constant 1.000000e+00 : f32
    %18 = vector.broadcast %cst_11 : f32 to vector<4x128xf32>
    %19 = arith.addf %18, %17 : vector<4x128xf32>
    %20 = arith.divf %18, %19 : vector<4x128xf32>
    %21 = vector.extract_strided_slice %20 {offsets = [0, 0], sizes = [4, 64], strides = [1, 1]} : vector<4x128xf32> to vector<4x64xf32>
    %22 = vector.extract_strided_slice %20 {offsets = [0, 64], sizes = [4, 64], strides = [1, 1]} : vector<4x128xf32> to vector<4x64xf32>
    %23 = vector.extract_strided_slice %9 {offsets = [0, 128], sizes = [4, 64], strides = [1, 1]} : vector<4x192xf32> to vector<4x64xf32>
    %24 = vector.extract_strided_slice %12 {offsets = [0, 128], sizes = [4, 64], strides = [1, 1]} : vector<4x192xf32> to vector<4x64xf32>
    %25 = arith.mulf %21, %24 : vector<4x64xf32>
    %26 = arith.addf %23, %25 : vector<4x64xf32>
    %27 = math.tanh %26 : vector<4x64xf32>
    %cst_12 = arith.constant 1.000000e+00 : f32
    %28 = vector.broadcast %cst_12 : f32 to vector<4x64xf32>
    %29 = arith.subf %28, %22 : vector<4x64xf32>
    %30 = arith.mulf %29, %27 : vector<4x64xf32>
    %31 = arith.mulf %22, %8 : vector<4x64xf32>
    %32 = arith.addf %30, %31 : vector<4x64xf32>
    %c0_13 = arith.constant 0 : index
    %c0_14 = arith.constant 0 : index
    %33 = vector.load %arg10[%c0_13, %c0_14] : memref<32x64xf32, #tpu.memory_space<vmem>>, vector<4x64xf32>
    tpu.vector_store %arg10[%c0_13, %c0_14], %32 {strides = array<i32>} : memref<32x64xf32, #tpu.memory_space<vmem>>, vector<4x64xf32>,
    %34 = vector.extract_strided_slice %5 {offsets = [4, 0], sizes = [4, 192], strides = [1, 1]} : vector<32x192xf32> to vector<4x192xf32>
    %cst_15 = arith.constant dense<0.000000e+00> : vector<4x192xf32>
    %35 = tpu.matmul %32, %6, %cst_15 {dimension_numbers = #tpu.dot_dimension_numbers<[1], [0], [0], [1], [0, 0, 1, 1], [], []>} : vector<4x64xf32>, vector<64x192xf32>, vector<4x192xf32> -> vector<4x192xf32>
    %36 = vector.broadcast %7 : vector<1x192xf32> to vector<4x192xf32>
    %37 = arith.addf %35, %36 : vector<4x192xf32>
    %38 = vector.extract_strided_slice %34 {offsets = [0, 0], sizes = [4, 128], strides = [1, 1]} : vector<4x192xf32> to vector<4x128xf32>
    %39 = vector.extract_strided_slice %37 {offsets = [0, 0], sizes = [4, 128], strides = [1, 1]} : vector<4x192xf32> to vector<4x128xf32>
    %40 = arith.addf %38, %39 : vector<4x128xf32>
    %41 = arith.negf %40 : vector<4x128xf32>
    %42 = math.exp %41 : vector<4x128xf32>
    %cst_16 = arith.constant 1.000000e+00 : f32
    %43 = vector.broadcast %cst_16 : f32 to vector<4x128xf32>
    %44 = arith.addf %43, %42 : vector<4x128xf32>
    %45 = arith.divf %43, %44 : vector<4x128xf32>
    %46 = vector.extract_strided_slice %45 {offsets = [0, 0], sizes = [4, 64], strides = [1, 1]} : vector<4x128xf32> to vector<4x64xf32>
    %47 = vector.extract_strided_slice %45 {offsets = [0, 64], sizes = [4, 64], strides = [1, 1]} : vector<4x128xf32> to vector<4x64xf32>
    %48 = vector.extract_strided_slice %34 {offsets = [0, 128], sizes = [4, 64], strides = [1, 1]} : vector<4x192xf32> to vector<4x64xf32>
    %49 = vector.extract_strided_slice %37 {offsets = [0, 128], sizes = [4, 64], strides = [1, 1]} : vector<4x192xf32> to vector<4x64xf32>
    %50 = arith.mulf %46, %49 : vector<4x64xf32>
    %51 = arith.addf %48, %50 : vector<4x64xf32>
    %52 = math.tanh %51 : vector<4x64xf32>
    %cst_17 = arith.constant 1.000000e+00 : f32
    %53 = vector.broadcast %cst_17 : f32 to vector<4x64xf32>
    %54 = arith.subf %53, %47 : vector<4x64xf32>
    %55 = arith.mulf %54, %52 : vector<4x64xf32>
    %56 = arith.mulf %47, %32 : vector<4x64xf32>
    %57 = arith.addf %55, %56 : vector<4x64xf32>
    %c4 = arith.constant 4 : index
    %c0_18 = arith.constant 0 : index
    %58 = vector.load %arg10[%c4, %c0_18] : memref<32x64xf32, #tpu.memory_space<vmem>>, vector<4x64xf32>
    tpu.vector_store %arg10[%c4, %c0_18], %57 {strides = array<i32>} : memref<32x64xf32, #tpu.memory_space<vmem>>, vector<4x64xf32>,
    %59 = vector.extract_strided_slice %5 {offsets = [8, 0], sizes = [4, 192], strides = [1, 1]} : vector<32x192xf32> to vector<4x192xf32>
    %cst_19 = arith.constant dense<0.000000e+00> : vector<4x192xf32>
    %60 = tpu.matmul %57, %6, %cst_19 {dimension_numbers = #tpu.dot_dimension_numbers<[1], [0], [0], [1], [0, 0, 1, 1], [], []>} : vector<4x64xf32>, vector<64x192xf32>, vector<4x192xf32> -> vector<4x192xf32>
    %61 = vector.broadcast %7 : vector<1x192xf32> to vector<4x192xf32>
    %62 = arith.addf %60, %61 : vector<4x192xf32>
    %63 = vector.extract_strided_slice %59 {offsets = [0, 0], sizes = [4, 128], strides = [1, 1]} : vector<4x192xf32> to vector<4x128xf32>
    %64 = vector.extract_strided_slice %62 {offsets = [0, 0], sizes = [4, 128], strides = [1, 1]} : vector<4x192xf32> to vector<4x128xf32>
    %65 = arith.addf %63, %64 : vector<4x128xf32>
    %66 = arith.negf %65 : vector<4x128xf32>
    %67 = math.exp %66 : vector<4x128xf32>
    %cst_20 = arith.constant 1.000000e+00 : f32
    %68 = vector.broadcast %cst_20 : f32 to vector<4x128xf32>
    %69 = arith.addf %68, %67 : vector<4x128xf32>
    %70 = arith.divf %68, %69 : vector<4x128xf32>
    %71 = vector.extract_strided_slice %70 {offsets = [0, 0], sizes = [4, 64], strides = [1, 1]} : vector<4x128xf32> to vector<4x64xf32>
    %72 = vector.extract_strided_slice %70 {offsets = [0, 64], sizes = [4, 64], strides = [1, 1]} : vector<4x128xf32> to vector<4x64xf32>
    %73 = vector.extract_strided_slice %59 {offsets = [0, 128], sizes = [4, 64], strides = [1, 1]} : vector<4x192xf32> to vector<4x64xf32>
    %74 = vector.extract_strided_slice %62 {offsets = [0, 128], sizes = [4, 64], strides = [1, 1]} : vector<4x192xf32> to vector<4x64xf32>
    %75 = arith.mulf %71, %74 : vector<4x64xf32>
    %76 = arith.addf %73, %75 : vector<4x64xf32>
    %77 = math.tanh %76 : vector<4x64xf32>
    %cst_21 = arith.constant 1.000000e+00 : f32
    %78 = vector.broadcast %cst_21 : f32 to vector<4x64xf32>
    %79 = arith.subf %78, %72 : vector<4x64xf32>
    %80 = arith.mulf %79, %77 : vector<4x64xf32>
    %81 = arith.mulf %72, %57 : vector<4x64xf32>
    %82 = arith.addf %80, %81 : vector<4x64xf32>
    %c8 = arith.constant 8 : index
    %c0_22 = arith.constant 0 : index
    %83 = vector.load %arg10[%c8, %c0_22] : memref<32x64xf32, #tpu.memory_space<vmem>>, vector<4x64xf32>
    tpu.vector_store %arg10[%c8, %c0_22], %82 {strides = array<i32>} : memref<32x64xf32, #tpu.memory_space<vmem>>, vector<4x64xf32>,
    %84 = vector.extract_strided_slice %5 {offsets = [12, 0], sizes = [4, 192], strides = [1, 1]} : vector<32x192xf32> to vector<4x192xf32>
    %cst_23 = arith.constant dense<0.000000e+00> : vector<4x192xf32>
    %85 = tpu.matmul %82, %6, %cst_23 {dimension_numbers = #tpu.dot_dimension_numbers<[1], [0], [0], [1], [0, 0, 1, 1], [], []>} : vector<4x64xf32>, vector<64x192xf32>, vector<4x192xf32> -> vector<4x192xf32>
    %86 = vector.broadcast %7 : vector<1x192xf32> to vector<4x192xf32>
    %87 = arith.addf %85, %86 : vector<4x192xf32>
    %88 = vector.extract_strided_slice %84 {offsets = [0, 0], sizes = [4, 128], strides = [1, 1]} : vector<4x192xf32> to vector<4x128xf32>
    %89 = vector.extract_strided_slice %87 {offsets = [0, 0], sizes = [4, 128], strides = [1, 1]} : vector<4x192xf32> to vector<4x128xf32>
    %90 = arith.addf %88, %89 : vector<4x128xf32>
    %91 = arith.negf %90 : vector<4x128xf32>
    %92 = math.exp %91 : vector<4x128xf32>
    %cst_24 = arith.constant 1.000000e+00 : f32
    %93 = vector.broadcast %cst_24 : f32 to vector<4x128xf32>
    %94 = arith.addf %93, %92 : vector<4x128xf32>
    %95 = arith.divf %93, %94 : vector<4x128xf32>
    %96 = vector.extract_strided_slice %95 {offsets = [0, 0], sizes = [4, 64], strides = [1, 1]} : vector<4x128xf32> to vector<4x64xf32>
    %97 = vector.extract_strided_slice %95 {offsets = [0, 64], sizes = [4, 64], strides = [1, 1]} : vector<4x128xf32> to vector<4x64xf32>
    %98 = vector.extract_strided_slice %84 {offsets = [0, 128], sizes = [4, 64], strides = [1, 1]} : vector<4x192xf32> to vector<4x64xf32>
    %99 = vector.extract_strided_slice %87 {offsets = [0, 128], sizes = [4, 64], strides = [1, 1]} : vector<4x192xf32> to vector<4x64xf32>
    %100 = arith.mulf %96, %99 : vector<4x64xf32>
    %101 = arith.addf %98, %100 : vector<4x64xf32>
    %102 = math.tanh %101 : vector<4x64xf32>
    %cst_25 = arith.constant 1.000000e+00 : f32
    %103 = vector.broadcast %cst_25 : f32 to vector<4x64xf32>
    %104 = arith.subf %103, %97 : vector<4x64xf32>
    %105 = arith.mulf %104, %102 : vector<4x64xf32>
    %106 = arith.mulf %97, %82 : vector<4x64xf32>
    %107 = arith.addf %105, %106 : vector<4x64xf32>
    %c12 = arith.constant 12 : index
    %c0_26 = arith.constant 0 : index
    %108 = vector.load %arg10[%c12, %c0_26] : memref<32x64xf32, #tpu.memory_space<vmem>>, vector<4x64xf32>
    tpu.vector_store %arg10[%c12, %c0_26], %107 {strides = array<i32>} : memref<32x64xf32, #tpu.memory_space<vmem>>, vector<4x64xf32>,
    %109 = vector.extract_strided_slice %5 {offsets = [16, 0], sizes = [4, 192], strides = [1, 1]} : vector<32x192xf32> to vector<4x192xf32>
    %cst_27 = arith.constant dense<0.000000e+00> : vector<4x192xf32>
    %110 = tpu.matmul %107, %6, %cst_27 {dimension_numbers = #tpu.dot_dimension_numbers<[1], [0], [0], [1], [0, 0, 1, 1], [], []>} : vector<4x64xf32>, vector<64x192xf32>, vector<4x192xf32> -> vector<4x192xf32>
    %111 = vector.broadcast %7 : vector<1x192xf32> to vector<4x192xf32>
    %112 = arith.addf %110, %111 : vector<4x192xf32>
    %113 = vector.extract_strided_slice %109 {offsets = [0, 0], sizes = [4, 128], strides = [1, 1]} : vector<4x192xf32> to vector<4x128xf32>
    %114 = vector.extract_strided_slice %112 {offsets = [0, 0], sizes = [4, 128], strides = [1, 1]} : vector<4x192xf32> to vector<4x128xf32>
    %115 = arith.addf %113, %114 : vector<4x128xf32>
    %116 = arith.negf %115 : vector<4x128xf32>
    %117 = math.exp %116 : vector<4x128xf32>
    %cst_28 = arith.constant 1.000000e+00 : f32
    %118 = vector.broadcast %cst_28 : f32 to vector<4x128xf32>
    %119 = arith.addf %118, %117 : vector<4x128xf32>
    %120 = arith.divf %118, %119 : vector<4x128xf32>
    %121 = vector.extract_strided_slice %120 {offsets = [0, 0], sizes = [4, 64], strides = [1, 1]} : vector<4x128xf32> to vector<4x64xf32>
    %122 = vector.extract_strided_slice %120 {offsets = [0, 64], sizes = [4, 64], strides = [1, 1]} : vector<4x128xf32> to vector<4x64xf32>
    %123 = vector.extract_strided_slice %109 {offsets = [0, 128], sizes = [4, 64], strides = [1, 1]} : vector<4x192xf32> to vector<4x64xf32>
    %124 = vector.extract_strided_slice %112 {offsets = [0, 128], sizes = [4, 64], strides = [1, 1]} : vector<4x192xf32> to vector<4x64xf32>
    %125 = arith.mulf %121, %124 : vector<4x64xf32>
    %126 = arith.addf %123, %125 : vector<4x64xf32>
    %127 = math.tanh %126 : vector<4x64xf32>
    %cst_29 = arith.constant 1.000000e+00 : f32
    %128 = vector.broadcast %cst_29 : f32 to vector<4x64xf32>
    %129 = arith.subf %128, %122 : vector<4x64xf32>
    %130 = arith.mulf %129, %127 : vector<4x64xf32>
    %131 = arith.mulf %122, %107 : vector<4x64xf32>
    %132 = arith.addf %130, %131 : vector<4x64xf32>
    %c16 = arith.constant 16 : index
    %c0_30 = arith.constant 0 : index
    %133 = vector.load %arg10[%c16, %c0_30] : memref<32x64xf32, #tpu.memory_space<vmem>>, vector<4x64xf32>
    tpu.vector_store %arg10[%c16, %c0_30], %132 {strides = array<i32>} : memref<32x64xf32, #tpu.memory_space<vmem>>, vector<4x64xf32>,
    %134 = vector.extract_strided_slice %5 {offsets = [20, 0], sizes = [4, 192], strides = [1, 1]} : vector<32x192xf32> to vector<4x192xf32>
    %cst_31 = arith.constant dense<0.000000e+00> : vector<4x192xf32>
    %135 = tpu.matmul %132, %6, %cst_31 {dimension_numbers = #tpu.dot_dimension_numbers<[1], [0], [0], [1], [0, 0, 1, 1], [], []>} : vector<4x64xf32>, vector<64x192xf32>, vector<4x192xf32> -> vector<4x192xf32>
    %136 = vector.broadcast %7 : vector<1x192xf32> to vector<4x192xf32>
    %137 = arith.addf %135, %136 : vector<4x192xf32>
    %138 = vector.extract_strided_slice %134 {offsets = [0, 0], sizes = [4, 128], strides = [1, 1]} : vector<4x192xf32> to vector<4x128xf32>
    %139 = vector.extract_strided_slice %137 {offsets = [0, 0], sizes = [4, 128], strides = [1, 1]} : vector<4x192xf32> to vector<4x128xf32>
    %140 = arith.addf %138, %139 : vector<4x128xf32>
    %141 = arith.negf %140 : vector<4x128xf32>
    %142 = math.exp %141 : vector<4x128xf32>
    %cst_32 = arith.constant 1.000000e+00 : f32
    %143 = vector.broadcast %cst_32 : f32 to vector<4x128xf32>
    %144 = arith.addf %143, %142 : vector<4x128xf32>
    %145 = arith.divf %143, %144 : vector<4x128xf32>
    %146 = vector.extract_strided_slice %145 {offsets = [0, 0], sizes = [4, 64], strides = [1, 1]} : vector<4x128xf32> to vector<4x64xf32>
    %147 = vector.extract_strided_slice %145 {offsets = [0, 64], sizes = [4, 64], strides = [1, 1]} : vector<4x128xf32> to vector<4x64xf32>
    %148 = vector.extract_strided_slice %134 {offsets = [0, 128], sizes = [4, 64], strides = [1, 1]} : vector<4x192xf32> to vector<4x64xf32>
    %149 = vector.extract_strided_slice %137 {offsets = [0, 128], sizes = [4, 64], strides = [1, 1]} : vector<4x192xf32> to vector<4x64xf32>
    %150 = arith.mulf %146, %149 : vector<4x64xf32>
    %151 = arith.addf %148, %150 : vector<4x64xf32>
    %152 = math.tanh %151 : vector<4x64xf32>
    %cst_33 = arith.constant 1.000000e+00 : f32
    %153 = vector.broadcast %cst_33 : f32 to vector<4x64xf32>
    %154 = arith.subf %153, %147 : vector<4x64xf32>
    %155 = arith.mulf %154, %152 : vector<4x64xf32>
    %156 = arith.mulf %147, %132 : vector<4x64xf32>
    %157 = arith.addf %155, %156 : vector<4x64xf32>
    %c20 = arith.constant 20 : index
    %c0_34 = arith.constant 0 : index
    %158 = vector.load %arg10[%c20, %c0_34] : memref<32x64xf32, #tpu.memory_space<vmem>>, vector<4x64xf32>
    tpu.vector_store %arg10[%c20, %c0_34], %157 {strides = array<i32>} : memref<32x64xf32, #tpu.memory_space<vmem>>, vector<4x64xf32>,
    %159 = vector.extract_strided_slice %5 {offsets = [24, 0], sizes = [4, 192], strides = [1, 1]} : vector<32x192xf32> to vector<4x192xf32>
    %cst_35 = arith.constant dense<0.000000e+00> : vector<4x192xf32>
    %160 = tpu.matmul %157, %6, %cst_35 {dimension_numbers = #tpu.dot_dimension_numbers<[1], [0], [0], [1], [0, 0, 1, 1], [], []>} : vector<4x64xf32>, vector<64x192xf32>, vector<4x192xf32> -> vector<4x192xf32>
    %161 = vector.broadcast %7 : vector<1x192xf32> to vector<4x192xf32>
    %162 = arith.addf %160, %161 : vector<4x192xf32>
    %163 = vector.extract_strided_slice %159 {offsets = [0, 0], sizes = [4, 128], strides = [1, 1]} : vector<4x192xf32> to vector<4x128xf32>
    %164 = vector.extract_strided_slice %162 {offsets = [0, 0], sizes = [4, 128], strides = [1, 1]} : vector<4x192xf32> to vector<4x128xf32>
    %165 = arith.addf %163, %164 : vector<4x128xf32>
    %166 = arith.negf %165 : vector<4x128xf32>
    %167 = math.exp %166 : vector<4x128xf32>
    %cst_36 = arith.constant 1.000000e+00 : f32
    %168 = vector.broadcast %cst_36 : f32 to vector<4x128xf32>
    %169 = arith.addf %168, %167 : vector<4x128xf32>
    %170 = arith.divf %168, %169 : vector<4x128xf32>
    %171 = vector.extract_strided_slice %170 {offsets = [0, 0], sizes = [4, 64], strides = [1, 1]} : vector<4x128xf32> to vector<4x64xf32>
    %172 = vector.extract_strided_slice %170 {offsets = [0, 64], sizes = [4, 64], strides = [1, 1]} : vector<4x128xf32> to vector<4x64xf32>
    %173 = vector.extract_strided_slice %159 {offsets = [0, 128], sizes = [4, 64], strides = [1, 1]} : vector<4x192xf32> to vector<4x64xf32>
    %174 = vector.extract_strided_slice %162 {offsets = [0, 128], sizes = [4, 64], strides = [1, 1]} : vector<4x192xf32> to vector<4x64xf32>
    %175 = arith.mulf %171, %174 : vector<4x64xf32>
    %176 = arith.addf %173, %175 : vector<4x64xf32>
    %177 = math.tanh %176 : vector<4x64xf32>
    %cst_37 = arith.constant 1.000000e+00 : f32
    %178 = vector.broadcast %cst_37 : f32 to vector<4x64xf32>
    %179 = arith.subf %178, %172 : vector<4x64xf32>
    %180 = arith.mulf %179, %177 : vector<4x64xf32>
    %181 = arith.mulf %172, %157 : vector<4x64xf32>
    %182 = arith.addf %180, %181 : vector<4x64xf32>
    %c24 = arith.constant 24 : index
    %c0_38 = arith.constant 0 : index
    %183 = vector.load %arg10[%c24, %c0_38] : memref<32x64xf32, #tpu.memory_space<vmem>>, vector<4x64xf32>
    tpu.vector_store %arg10[%c24, %c0_38], %182 {strides = array<i32>} : memref<32x64xf32, #tpu.memory_space<vmem>>, vector<4x64xf32>,
    %184 = vector.extract_strided_slice %5 {offsets = [28, 0], sizes = [4, 192], strides = [1, 1]} : vector<32x192xf32> to vector<4x192xf32>
    %cst_39 = arith.constant dense<0.000000e+00> : vector<4x192xf32>
    %185 = tpu.matmul %182, %6, %cst_39 {dimension_numbers = #tpu.dot_dimension_numbers<[1], [0], [0], [1], [0, 0, 1, 1], [], []>} : vector<4x64xf32>, vector<64x192xf32>, vector<4x192xf32> -> vector<4x192xf32>
    %186 = vector.broadcast %7 : vector<1x192xf32> to vector<4x192xf32>
    %187 = arith.addf %185, %186 : vector<4x192xf32>
    %188 = vector.extract_strided_slice %184 {offsets = [0, 0], sizes = [4, 128], strides = [1, 1]} : vector<4x192xf32> to vector<4x128xf32>
    %189 = vector.extract_strided_slice %187 {offsets = [0, 0], sizes = [4, 128], strides = [1, 1]} : vector<4x192xf32> to vector<4x128xf32>
    %190 = arith.addf %188, %189 : vector<4x128xf32>
    %191 = arith.negf %190 : vector<4x128xf32>
    %192 = math.exp %191 : vector<4x128xf32>
    %cst_40 = arith.constant 1.000000e+00 : f32
    %193 = vector.broadcast %cst_40 : f32 to vector<4x128xf32>
    %194 = arith.addf %193, %192 : vector<4x128xf32>
    %195 = arith.divf %193, %194 : vector<4x128xf32>
    %196 = vector.extract_strided_slice %195 {offsets = [0, 0], sizes = [4, 64], strides = [1, 1]} : vector<4x128xf32> to vector<4x64xf32>
    %197 = vector.extract_strided_slice %195 {offsets = [0, 64], sizes = [4, 64], strides = [1, 1]} : vector<4x128xf32> to vector<4x64xf32>
    %198 = vector.extract_strided_slice %184 {offsets = [0, 128], sizes = [4, 64], strides = [1, 1]} : vector<4x192xf32> to vector<4x64xf32>
    %199 = vector.extract_strided_slice %187 {offsets = [0, 128], sizes = [4, 64], strides = [1, 1]} : vector<4x192xf32> to vector<4x64xf32>
    %200 = arith.mulf %196, %199 : vector<4x64xf32>
    %201 = arith.addf %198, %200 : vector<4x64xf32>
    %202 = math.tanh %201 : vector<4x64xf32>
    %cst_41 = arith.constant 1.000000e+00 : f32
    %203 = vector.broadcast %cst_41 : f32 to vector<4x64xf32>
    %204 = arith.subf %203, %197 : vector<4x64xf32>
    %205 = arith.mulf %204, %202 : vector<4x64xf32>
    %206 = arith.mulf %197, %182 : vector<4x64xf32>
    %207 = arith.addf %205, %206 : vector<4x64xf32>
    %c28 = arith.constant 28 : index
    %c0_42 = arith.constant 0 : index
    %208 = vector.load %arg10[%c28, %c0_42] : memref<32x64xf32, #tpu.memory_space<vmem>>, vector<4x64xf32>
    tpu.vector_store %arg10[%c28, %c0_42], %207 {strides = array<i32>} : memref<32x64xf32, #tpu.memory_space<vmem>>, vector<4x64xf32>,
    %c0_43 = arith.constant 0 : index
    %c0_44 = arith.constant 0 : index
    %209 = vector.load %arg10[%c0_43, %c0_44] : memref<32x64xf32, #tpu.memory_space<vmem>>, vector<32x64xf32>
    %c0_45 = arith.constant 0 : index
    %c0_46 = arith.constant 0 : index
    %210 = vector.load %arg5[%c0_45, %c0_46] : memref<64x128xf32, #tpu.memory_space<vmem>>, vector<64x128xf32>
    %cst_47 = arith.constant dense<0.000000e+00> : vector<32x128xf32>
    %211 = tpu.matmul %209, %210, %cst_47 {dimension_numbers = #tpu.dot_dimension_numbers<[1], [0], [0], [1], [0, 0, 1, 1], [], []>} : vector<32x64xf32>, vector<64x128xf32>, vector<32x128xf32> -> vector<32x128xf32>
    %c0_48 = arith.constant 0 : index
    %c0_49 = arith.constant 0 : index
    %212 = vector.load %arg6[%c0_48, %c0_49] : memref<1x32xf32, #tpu.memory_space<vmem>>, vector<1x32xf32>
    %213 = vector.extract_strided_slice %211 {offsets = [0, 0], sizes = [4, 64], strides = [1, 1]} : vector<32x128xf32> to vector<4x64xf32>
    %214 = vector.extract_strided_slice %211 {offsets = [28, 64], sizes = [4, 64], strides = [1, 1]} : vector<32x128xf32> to vector<4x64xf32>
    %215 = arith.addf %213, %214 : vector<4x64xf32>
    %216 = vector.extract_strided_slice %215 {offsets = [0, 0], sizes = [3, 32], strides = [1, 1]} : vector<4x64xf32> to vector<3x32xf32>
    %217 = vector.extract_strided_slice %215 {offsets = [1, 32], sizes = [3, 32], strides = [1, 1]} : vector<4x64xf32> to vector<3x32xf32>
    %218 = arith.addf %216, %217 : vector<3x32xf32>
    %219 = vector.broadcast %212 : vector<1x32xf32> to vector<3x32xf32>
    %220 = arith.addf %218, %219 : vector<3x32xf32>
    %cst_50 = arith.constant dense<0xFF800000> : vector<32xf32>
    %221 = vector.multi_reduction <maximumf>, %220, %cst_50 [0] : vector<3x32xf32> to vector<32xf32>
    %222 = vector.shape_cast %221 : vector<32xf32> to vector<1x32xf32>
    %cst_51 = arith.constant 0.000000e+00 : f32
    %223 = vector.broadcast %cst_51 : f32 to vector<1x32xf32>
    %224 = arith.maximumf %222, %223 : vector<1x32xf32>
    %225 = vector.extract_strided_slice %211 {offsets = [4, 0], sizes = [4, 64], strides = [1, 1]} : vector<32x128xf32> to vector<4x64xf32>
    %226 = vector.extract_strided_slice %211 {offsets = [24, 64], sizes = [4, 64], strides = [1, 1]} : vector<32x128xf32> to vector<4x64xf32>
    %227 = arith.addf %225, %226 : vector<4x64xf32>
    %228 = vector.extract_strided_slice %227 {offsets = [0, 0], sizes = [3, 32], strides = [1, 1]} : vector<4x64xf32> to vector<3x32xf32>
    %229 = vector.extract_strided_slice %227 {offsets = [1, 32], sizes = [3, 32], strides = [1, 1]} : vector<4x64xf32> to vector<3x32xf32>
    %230 = arith.addf %228, %229 : vector<3x32xf32>
    %231 = vector.broadcast %212 : vector<1x32xf32> to vector<3x32xf32>
    %232 = arith.addf %230, %231 : vector<3x32xf32>
    %cst_52 = arith.constant dense<0xFF800000> : vector<32xf32>
    %233 = vector.multi_reduction <maximumf>, %232, %cst_52 [0] : vector<3x32xf32> to vector<32xf32>
    %234 = vector.shape_cast %233 : vector<32xf32> to vector<1x32xf32>
    %cst_53 = arith.constant 0.000000e+00 : f32
    %235 = vector.broadcast %cst_53 : f32 to vector<1x32xf32>
    %236 = arith.maximumf %234, %235 : vector<1x32xf32>
    %237 = vector.extract_strided_slice %211 {offsets = [8, 0], sizes = [4, 64], strides = [1, 1]} : vector<32x128xf32> to vector<4x64xf32>
    %238 = vector.extract_strided_slice %211 {offsets = [20, 64], sizes = [4, 64], strides = [1, 1]} : vector<32x128xf32> to vector<4x64xf32>
    %239 = arith.addf %237, %238 : vector<4x64xf32>
    %240 = vector.extract_strided_slice %239 {offsets = [0, 0], sizes = [3, 32], strides = [1, 1]} : vector<4x64xf32> to vector<3x32xf32>
    %241 = vector.extract_strided_slice %239 {offsets = [1, 32], sizes = [3, 32], strides = [1, 1]} : vector<4x64xf32> to vector<3x32xf32>
    %242 = arith.addf %240, %241 : vector<3x32xf32>
    %243 = vector.broadcast %212 : vector<1x32xf32> to vector<3x32xf32>
    %244 = arith.addf %242, %243 : vector<3x32xf32>
    %cst_54 = arith.constant dense<0xFF800000> : vector<32xf32>
    %245 = vector.multi_reduction <maximumf>, %244, %cst_54 [0] : vector<3x32xf32> to vector<32xf32>
    %246 = vector.shape_cast %245 : vector<32xf32> to vector<1x32xf32>
    %cst_55 = arith.constant 0.000000e+00 : f32
    %247 = vector.broadcast %cst_55 : f32 to vector<1x32xf32>
    %248 = arith.maximumf %246, %247 : vector<1x32xf32>
    %249 = vector.extract_strided_slice %211 {offsets = [12, 0], sizes = [4, 64], strides = [1, 1]} : vector<32x128xf32> to vector<4x64xf32>
    %250 = vector.extract_strided_slice %211 {offsets = [16, 64], sizes = [4, 64], strides = [1, 1]} : vector<32x128xf32> to vector<4x64xf32>
    %251 = arith.addf %249, %250 : vector<4x64xf32>
    %252 = vector.extract_strided_slice %251 {offsets = [0, 0], sizes = [3, 32], strides = [1, 1]} : vector<4x64xf32> to vector<3x32xf32>
    %253 = vector.extract_strided_slice %251 {offsets = [1, 32], sizes = [3, 32], strides = [1, 1]} : vector<4x64xf32> to vector<3x32xf32>
    %254 = arith.addf %252, %253 : vector<3x32xf32>
    %255 = vector.broadcast %212 : vector<1x32xf32> to vector<3x32xf32>
    %256 = arith.addf %254, %255 : vector<3x32xf32>
    %cst_56 = arith.constant dense<0xFF800000> : vector<32xf32>
    %257 = vector.multi_reduction <maximumf>, %256, %cst_56 [0] : vector<3x32xf32> to vector<32xf32>
    %258 = vector.shape_cast %257 : vector<32xf32> to vector<1x32xf32>
    %cst_57 = arith.constant 0.000000e+00 : f32
    %259 = vector.broadcast %cst_57 : f32 to vector<1x32xf32>
    %260 = arith.maximumf %258, %259 : vector<1x32xf32>
    %261 = vector.extract_strided_slice %211 {offsets = [16, 0], sizes = [4, 64], strides = [1, 1]} : vector<32x128xf32> to vector<4x64xf32>
    %262 = vector.extract_strided_slice %211 {offsets = [12, 64], sizes = [4, 64], strides = [1, 1]} : vector<32x128xf32> to vector<4x64xf32>
    %263 = arith.addf %261, %262 : vector<4x64xf32>
    %264 = vector.extract_strided_slice %263 {offsets = [0, 0], sizes = [3, 32], strides = [1, 1]} : vector<4x64xf32> to vector<3x32xf32>
    %265 = vector.extract_strided_slice %263 {offsets = [1, 32], sizes = [3, 32], strides = [1, 1]} : vector<4x64xf32> to vector<3x32xf32>
    %266 = arith.addf %264, %265 : vector<3x32xf32>
    %267 = vector.broadcast %212 : vector<1x32xf32> to vector<3x32xf32>
    %268 = arith.addf %266, %267 : vector<3x32xf32>
    %cst_58 = arith.constant dense<0xFF800000> : vector<32xf32>
    %269 = vector.multi_reduction <maximumf>, %268, %cst_58 [0] : vector<3x32xf32> to vector<32xf32>
    %270 = vector.shape_cast %269 : vector<32xf32> to vector<1x32xf32>
    %cst_59 = arith.constant 0.000000e+00 : f32
    %271 = vector.broadcast %cst_59 : f32 to vector<1x32xf32>
    %272 = arith.maximumf %270, %271 : vector<1x32xf32>
    %273 = vector.extract_strided_slice %211 {offsets = [20, 0], sizes = [4, 64], strides = [1, 1]} : vector<32x128xf32> to vector<4x64xf32>
    %274 = vector.extract_strided_slice %211 {offsets = [8, 64], sizes = [4, 64], strides = [1, 1]} : vector<32x128xf32> to vector<4x64xf32>
    %275 = arith.addf %273, %274 : vector<4x64xf32>
    %276 = vector.extract_strided_slice %275 {offsets = [0, 0], sizes = [3, 32], strides = [1, 1]} : vector<4x64xf32> to vector<3x32xf32>
    %277 = vector.extract_strided_slice %275 {offsets = [1, 32], sizes = [3, 32], strides = [1, 1]} : vector<4x64xf32> to vector<3x32xf32>
    %278 = arith.addf %276, %277 : vector<3x32xf32>
    %279 = vector.broadcast %212 : vector<1x32xf32> to vector<3x32xf32>
    %280 = arith.addf %278, %279 : vector<3x32xf32>
    %cst_60 = arith.constant dense<0xFF800000> : vector<32xf32>
    %281 = vector.multi_reduction <maximumf>, %280, %cst_60 [0] : vector<3x32xf32> to vector<32xf32>
    %282 = vector.shape_cast %281 : vector<32xf32> to vector<1x32xf32>
    %cst_61 = arith.constant 0.000000e+00 : f32
    %283 = vector.broadcast %cst_61 : f32 to vector<1x32xf32>
    %284 = arith.maximumf %282, %283 : vector<1x32xf32>
    %285 = vector.extract_strided_slice %211 {offsets = [24, 0], sizes = [4, 64], strides = [1, 1]} : vector<32x128xf32> to vector<4x64xf32>
    %286 = vector.extract_strided_slice %211 {offsets = [4, 64], sizes = [4, 64], strides = [1, 1]} : vector<32x128xf32> to vector<4x64xf32>
    %287 = arith.addf %285, %286 : vector<4x64xf32>
    %288 = vector.extract_strided_slice %287 {offsets = [0, 0], sizes = [3, 32], strides = [1, 1]} : vector<4x64xf32> to vector<3x32xf32>
    %289 = vector.extract_strided_slice %287 {offsets = [1, 32], sizes = [3, 32], strides = [1, 1]} : vector<4x64xf32> to vector<3x32xf32>
    %290 = arith.addf %288, %289 : vector<3x32xf32>
    %291 = vector.broadcast %212 : vector<1x32xf32> to vector<3x32xf32>
    %292 = arith.addf %290, %291 : vector<3x32xf32>
    %cst_62 = arith.constant dense<0xFF800000> : vector<32xf32>
    %293 = vector.multi_reduction <maximumf>, %292, %cst_62 [0] : vector<3x32xf32> to vector<32xf32>
    %294 = vector.shape_cast %293 : vector<32xf32> to vector<1x32xf32>
    %cst_63 = arith.constant 0.000000e+00 : f32
    %295 = vector.broadcast %cst_63 : f32 to vector<1x32xf32>
    %296 = arith.maximumf %294, %295 : vector<1x32xf32>
    %297 = vector.extract_strided_slice %211 {offsets = [28, 0], sizes = [4, 64], strides = [1, 1]} : vector<32x128xf32> to vector<4x64xf32>
    %298 = vector.extract_strided_slice %211 {offsets = [0, 64], sizes = [4, 64], strides = [1, 1]} : vector<32x128xf32> to vector<4x64xf32>
    %299 = arith.addf %297, %298 : vector<4x64xf32>
    %300 = vector.extract_strided_slice %299 {offsets = [0, 0], sizes = [3, 32], strides = [1, 1]} : vector<4x64xf32> to vector<3x32xf32>
    %301 = vector.extract_strided_slice %299 {offsets = [1, 32], sizes = [3, 32], strides = [1, 1]} : vector<4x64xf32> to vector<3x32xf32>
    %302 = arith.addf %300, %301 : vector<3x32xf32>
    %303 = vector.broadcast %212 : vector<1x32xf32> to vector<3x32xf32>
    %304 = arith.addf %302, %303 : vector<3x32xf32>
    %cst_64 = arith.constant dense<0xFF800000> : vector<32xf32>
    %305 = vector.multi_reduction <maximumf>, %304, %cst_64 [0] : vector<3x32xf32> to vector<32xf32>
    %306 = vector.shape_cast %305 : vector<32xf32> to vector<1x32xf32>
    %cst_65 = arith.constant 0.000000e+00 : f32
    %307 = vector.broadcast %cst_65 : f32 to vector<1x32xf32>
    %308 = arith.maximumf %306, %307 : vector<1x32xf32>
    %309 = tpu.concatenate %224, %236, %248, %260, %272, %284, %296, %308 in 0 : vector<1x32xf32>, vector<1x32xf32>, vector<1x32xf32>, vector<1x32xf32>, vector<1x32xf32>, vector<1x32xf32>, vector<1x32xf32>, vector<1x32xf32> -> vector<8x32xf32>
    %c0_66 = arith.constant 0 : index
    %c0_67 = arith.constant 0 : index
    %310 = vector.load %arg7[%c0_66, %c0_67] : memref<32x5xf32, #tpu.memory_space<vmem>>, vector<32x5xf32>
    %cst_68 = arith.constant dense<0.000000e+00> : vector<8x5xf32>
    %311 = tpu.matmul %309, %310, %cst_68 {dimension_numbers = #tpu.dot_dimension_numbers<[1], [0], [0], [1], [0, 0, 1, 1], [], []>} : vector<8x32xf32>, vector<32x5xf32>, vector<8x5xf32> -> vector<8x5xf32>
    %c0_69 = arith.constant 0 : index
    %c0_70 = arith.constant 0 : index
    %312 = vector.load %arg8[%c0_69, %c0_70] : memref<1x5xf32, #tpu.memory_space<vmem>>, vector<1x5xf32>
    %313 = vector.broadcast %312 : vector<1x5xf32> to vector<8x5xf32>
    %314 = arith.addf %311, %313 : vector<8x5xf32>
    %c0_71 = arith.constant 0 : index
    %c0_72 = arith.constant 0 : index
    %315 = vector.load %arg9[%c0_71, %c0_72] : memref<8x5xf32, #tpu.memory_space<vmem>>, vector<8x5xf32>
    tpu.vector_store %arg9[%c0_71, %c0_72], %314 {strides = array<i32>} : memref<8x5xf32, #tpu.memory_space<vmem>>, vector<8x5xf32>,
    return
  }
}

</mosaic_0001>

<llo_original>
// kernel: _gru_cnn_forward_impl.1
$region0: #{_gru_cnn_forward_impl.1}
  #allocation0 [shape = 'u32[]', space=smem, size = 0x4, offset = 0x4, fixed_abs, tag = 'smem constant byte address 0x4 - core index']
  #allocation1 [shape = 'u32[72,128]{1,0:T(1,128)}', space=vmem, size = 0x9000, scoped, tag = 'internal scratch']
  #allocation2 [shape = 'f32[32,64]{1,0:T(8,128)}', space=vmem, size = 0x4000, scoped, tag = 'scratch operand']
  %s0 = inlined_call_operand.vmem [shape: f32[32,32], index: 0, kind: input, shape index: {}]
  %s1 = inlined_call_operand.vmem [shape: f32[32,192], index: 1, kind: input, shape index: {}]
  %s2 = inlined_call_operand.vmem [shape: f32[1,192], index: 2, kind: input, shape index: {}]
  %s3 = inlined_call_operand.vmem [shape: f32[64,192], index: 3, kind: input, shape index: {}]
  %s4 = inlined_call_operand.vmem [shape: f32[1,192], index: 4, kind: input, shape index: {}]
  %s5 = inlined_call_operand.vmem [shape: f32[64,128], index: 5, kind: input, shape index: {}]
  %s6 = inlined_call_operand.vmem [shape: f32[1,32], index: 6, kind: input, shape index: {}]
  %s7 = inlined_call_operand.vmem [shape: f32[32,5], index: 7, kind: input, shape index: {}]
  %s8 = inlined_call_operand.vmem [shape: f32[1,5], index: 8, kind: input, shape index: {}]
  %s9 = inlined_call_operand.hbm [shape: f32[8,5], index: 9, kind: output, shape index: {}]
  %s10 = sld [smem:[#allocation0]]
  $region46: #{_gru_cnn_forward_impl.1} parent=0
    _
  %s12 = ssub.s32 1, %s10
  %s13 = scalar_select 0, %s12, %s10
  $region1: #{_gru_cnn_forward_impl.1} parent=0
    #allocation3 [shape = 'u8[4096]{0}', space=vmem, size = 0x1000, scoped, tag = 'output window, operand 0, single buffered']
    #allocation4 [shape = 's32[1]{0}', space=sflag, size = 0x4, scoped, tag = 'scoped memory for _gru_cnn_forward_impl.1']
    %14 = vsyncpa [#allocation4], 0
    // Predicated region
    $region2: #{_gru_cnn_forward_impl.1} parent=1 // pred_check
      _
    $region3: #{_gru_cnn_forward_impl.1} parent=1 // pred_check_branch
      %16 = sbr.rel (0) target = $region5
    $region4: #{_gru_cnn_forward_impl.1} parent=1 // pred_region
      _
    $region5: #{_gru_cnn_forward_impl.1} parent=1 // pred_fallthru
      _
    // Predicated region
    $region6: #{_gru_cnn_forward_impl.1} parent=1 // pred_check
      _
    $region7: #{_gru_cnn_forward_impl.1} parent=1 // pred_check_branch
      %18 = sbr.rel (0) target = $region9
    $region8: #{_gru_cnn_forward_impl.1} parent=1 // pred_region
      _
    $region9: #{_gru_cnn_forward_impl.1} parent=1 // pred_fallthru
      _
    // Predicated region
    $region10: #{_gru_cnn_forward_impl.1} parent=1 // pred_check
      _
    $region11: #{_gru_cnn_forward_impl.1} parent=1 // pred_check_branch
      %20 = sbr.rel (0) target = $region13
    $region12: #{_gru_cnn_forward_impl.1} parent=1 // pred_region
      _
    $region13: #{_gru_cnn_forward_impl.1} parent=1 // pred_fallthru
      _
    // Predicated region
    $region14: #{_gru_cnn_forward_impl.1} parent=1 // pred_check
      _
    $region15: #{_gru_cnn_forward_impl.1} parent=1 // pred_check_branch
      %22 = sbr.rel (0) target = $region17
    $region16: #{_gru_cnn_forward_impl.1} parent=1 // pred_region
      _
    $region17: #{_gru_cnn_forward_impl.1} parent=1 // pred_fallthru
      _
    // Predicated region
    $region18: #{_gru_cnn_forward_impl.1} parent=1 // pred_check
      _
    $region19: #{_gru_cnn_forward_impl.1} parent=1 // pred_check_branch
      %24 = sbr.rel (0) target = $region21
    $region20: #{_gru_cnn_forward_impl.1} parent=1 // pred_region
      _
    $region21: #{_gru_cnn_forward_impl.1} parent=1 // pred_fallthru
      _
    // Predicated region
    $region22: #{_gru_cnn_forward_impl.1} parent=1 // pred_check
      _
    $region23: #{_gru_cnn_forward_impl.1} parent=1 // pred_check_branch
      %26 = sbr.rel (0) target = $region25
    $region24: #{_gru_cnn_forward_impl.1} parent=1 // pred_region
      _
    $region25: #{_gru_cnn_forward_impl.1} parent=1 // pred_fallthru
      _
    // Predicated region
    $region26: #{_gru_cnn_forward_impl.1} parent=1 // pred_check
      _
    $region27: #{_gru_cnn_forward_impl.1} parent=1 // pred_check_branch
      %28 = sbr.rel (0) target = $region29
    $region28: #{_gru_cnn_forward_impl.1} parent=1 // pred_region
      _
    $region29: #{_gru_cnn_forward_impl.1} parent=1 // pred_fallthru
      _
    // Predicated region
    $region30: #{_gru_cnn_forward_impl.1} parent=1 // pred_check
      _
    $region31: #{_gru_cnn_forward_impl.1} parent=1 // pred_check_branch
      %30 = sbr.rel (0) target = $region33
    $region32: #{_gru_cnn_forward_impl.1} parent=1 // pred_region
      _
    $region33: #{_gru_cnn_forward_impl.1} parent=1 // pred_fallthru
      _
    // Predicated region
    $region34: #{_gru_cnn_forward_impl.1} parent=1 // pred_check
      _
    $region35: #{_gru_cnn_forward_impl.1} parent=1 // pred_check_branch
      %32 = sbr.rel (0) target = $region37
    $region36: #{_gru_cnn_forward_impl.1} parent=1 // pred_region
      _
    $region37: #{_gru_cnn_forward_impl.1} parent=1 // pred_fallthru
      _
    %v33 = vld [vmem:[%s0] sm:$0xff]
    %v34 = vld [vmem:[%s0 + $0x8] sm:$0xff]
    %v35 = vld [vmem:[%s0 + $0x10] sm:$0xff]
    %v36 = vld [vmem:[%s0 + $0x18] sm:$0xff]
    %v37 = vld [vmem:[%s1] sm:$0xff]
    %v38 = vld [vmem:[%s1 + $0x8] sm:$0xff]
    %v39 = vld [vmem:[%s1 + $0x10] sm:$0xff]
    %v40 = vld [vmem:[%s1 + $0x18] sm:$0xff]
    %v41 = vld [vmem:[%s1 + $0x20] sm:$0xff]
    %v42 = vld [vmem:[%s1 + $0x28] sm:$0xff]
    %v43 = vld [vmem:[%s1 + $0x30] sm:$0xff]
    %v44 = vld [vmem:[%s1 + $0x38] sm:$0xff]
    %v45 = vld [vmem:[%s2] sm:$0x3]
    %v47 = vperm.slane %v45, 0
    %v48 = vperm.slane %v45, 1
    %vm51 = vcmask 261120
    %v53 = vsel %vm51, %v33, 0
    %v56 = vsel %vm51, %v34, 0
    %v59 = vsel %vm51, %v35, 0
    %v62 = vsel %vm51, %v36, 0
    %64 = vmatpush.msra.mxu0 0.0
    %65 = vmatpush.msra.mxu0 0.0
    %66 = vmatpush.msra.mxu0 0.0
    %67 = vmatpush.msra.mxu0 0.0
    %68 = vmatpush.msra.mxu0 0.0
    %69 = vmatpush.msra.mxu0 0.0
    %70 = vmatpush.msra.mxu0 0.0
    %71 = vmatpush.msra.mxu0 0.0
    %72 = vmatpush.msra.mxu0 0.0
    %73 = vmatpush.msra.mxu0 0.0
    %74 = vmatpush.msra.mxu0 0.0
    %75 = vmatpush.msra.mxu0 0.0
    %76 = vmatpush.msra.mxu0 %v43
    %77 = vmatpush.msra.mxu0 %v41
    %78 = vmatpush.msra.mxu0 %v39
    %79 = vmatpush.msra.mxu0 %v37
    %80 = vmatmul.f32.gmra.mxu0 %v53
    %v81 = vpop.f32.mrf.mxu0
    %v82 = vadd.f32 %v47, %v81
    %83 = vmatmul.f32.gmra.mxu0 %v56
    %v84 = vpop.f32.mrf.mxu0
    %v85 = vadd.f32 %v47, %v84
    %86 = vmatmul.f32.gmra.mxu0 %v59
    %v87 = vpop.f32.mrf.mxu0
    %v88 = vadd.f32 %v47, %v87
    %89 = vmatmul.f32.gmra.mxu0 %v62
    %v90 = vpop.f32.mrf.mxu0
    %v91 = vadd.f32 %v47, %v90
    %92 = vdwg.mxu0
    %93 = vmatpush.msra.mxu0 0.0
    %94 = vmatpush.msra.mxu0 0.0
    %95 = vmatpush.msra.mxu0 0.0
    %96 = vmatpush.msra.mxu0 0.0
    %97 = vmatpush.msra.mxu0 0.0
    %98 = vmatpush.msra.mxu0 0.0
    %99 = vmatpush.msra.mxu0 0.0
    %100 = vmatpush.msra.mxu0 0.0
    %101 = vmatpush.msra.mxu0 0.0
    %102 = vmatpush.msra.mxu0 0.0
    %103 = vmatpush.msra.mxu0 0.0
    %104 = vmatpush.msra.mxu0 0.0
    %105 = vmatpush.msra.mxu0 %v44
    %106 = vmatpush.msra.mxu0 %v42
    %107 = vmatpush.msra.mxu0 %v40
    %108 = vmatpush.msra.mxu0 %v38
    %109 = vmatmul.f32.gmra.mxu0 %v53
    %v110 = vpop.f32.mrf.mxu0
    %v111 = vadd.f32 %v48, %v110
    %112 = vmatmul.f32.gmra.mxu0 %v56
    %v113 = vpop.f32.mrf.mxu0
    %v114 = vadd.f32 %v48, %v113
    %115 = vmatmul.f32.gmra.mxu0 %v59
    %v116 = vpop.f32.mrf.mxu0
    %v117 = vadd.f32 %v48, %v116
    %118 = vmatmul.f32.gmra.mxu0 %v62
    %v119 = vpop.f32.mrf.mxu0
    %v120 = vadd.f32 %v48, %v119
    %121 = vdwg.mxu0
    %v122 = vld [vmem:[%s3] sm:$0xff]
    %v123 = vld [vmem:[%s3 + $0x8] sm:$0xff]
    %v124 = vld [vmem:[%s3 + $0x10] sm:$0xff]
    %v125 = vld [vmem:[%s3 + $0x18] sm:$0xff]
    %v126 = vld [vmem:[%s3 + $0x20] sm:$0xff]
    %v127 = vld [vmem:[%s3 + $0x28] sm:$0xff]
    %v128 = vld [vmem:[%s3 + $0x30] sm:$0xff]
    %v129 = vld [vmem:[%s3 + $0x38] sm:$0xff]
    %v130 = vld [vmem:[%s3 + $0x40] sm:$0xff]
    %v131 = vld [vmem:[%s3 + $0x48] sm:$0xff]
    %v132 = vld [vmem:[%s3 + $0x50] sm:$0xff]
    %v133 = vld [vmem:[%s3 + $0x58] sm:$0xff]
    %v134 = vld [vmem:[%s3 + $0x60] sm:$0xff]
    %v135 = vld [vmem:[%s3 + $0x68] sm:$0xff]
    %v136 = vld [vmem:[%s3 + $0x70] sm:$0xff]
    %v137 = vld [vmem:[%s3 + $0x78] sm:$0xff]
    %v138 = vld [vmem:[%s4] sm:$0x3]
    %v140 = vperm.slane %v138, 0
    %v141 = vperm.slane %v138, 1
    %vm144 = vcmask 523264
    %v146 = vsel %vm144, 0.0, 0
    %148 = vmatpush.msra.mxu0 0.0
    %149 = vmatpush.msra.mxu0 0.0
    %150 = vmatpush.msra.mxu0 0.0
    %151 = vmatpush.msra.mxu0 0.0
    %152 = vmatpush.msra.mxu0 0.0
    %153 = vmatpush.msra.mxu0 0.0
    %154 = vmatpush.msra.mxu0 0.0
    %155 = vmatpush.msra.mxu0 0.0
    %156 = vmatpush.msra.mxu0 %v136
    %157 = vmatpush.msra.mxu0 %v134
    %158 = vmatpush.msra.mxu0 %v132
    %159 = vmatpush.msra.mxu0 %v130
    %160 = vmatpush.msra.mxu0 %v128
    %161 = vmatpush.msra.mxu0 %v126
    %162 = vmatpush.msra.mxu0 %v124
    %163 = vmatpush.msra.mxu0 %v122
    %164 = vmatmul.f32.gmra.mxu0 %v146
    %v165 = vpop.f32.mrf.mxu0
    %v166 = vadd.f32 %v140, %v165
    %167 = vdwg.mxu0
    %168 = vmatpush.msra.mxu0 0.0
    %169 = vmatpush.msra.mxu0 0.0
    %170 = vmatpush.msra.mxu0 0.0
    %171 = vmatpush.msra.mxu0 0.0
    %172 = vmatpush.msra.mxu0 0.0
    %173 = vmatpush.msra.mxu0 0.0
    %174 = vmatpush.msra.mxu0 0.0
    %175 = vmatpush.msra.mxu0 0.0
    %176 = vmatpush.msra.mxu0 %v137
    %177 = vmatpush.msra.mxu0 %v135
    %178 = vmatpush.msra.mxu0 %v133
    %179 = vmatpush.msra.mxu0 %v131
    %180 = vmatpush.msra.mxu0 %v129
    %181 = vmatpush.msra.mxu0 %v127
    %182 = vmatpush.msra.mxu0 %v125
    %183 = vmatpush.msra.mxu0 %v123
    %184 = vmatmul.f32.gmra.mxu0 %v146
    %v185 = vpop.f32.mrf.mxu0
    %v186 = vadd.f32 %v141, %v185
    %187 = vdwg.mxu0
    %v188 = vadd.f32 %v82, %v166
    %v189 = vxor.u32 %v188, 2147483648
    %v190 = vmul.f32 %v189, 1.442695
    %v191 = vpow.pop %v190
    %v192 = vadd.f32 %v191, 1.0
    %v193 = vrcp.pop %v192
    %v194 = vmul.f32 %v192, %v193
    %v195 = vsub.f32 1.0, %v194
    %v196 = vmul.f32 %v193, %v195
    %v197 = vadd.f32 %v193, %v196
    %vm198 = vweird.f32 %v192
    %vm199 = vweird.f32 %v193
    %vm200 = vmor %vm198, %vm199
    %v201 = vsel %vm200, %v193, %v197
    %v202 = vand.u32 2147483647, %v192
    %vm203 = vcmp.eq.f32.partialorder %v202, 8.507059e+37
    %v204 = vand.u32 %v192, 2147483648
    %v205 = vor.u32 1.1754944e-38, %v204
    %v206 = vsel %vm203, %v205, %v201
    %v207 = vmul.f32 1.0, %v206
    %v208 = vmul.f32 %v207, %v186
    %v209 = vadd.f32 %v111, %v208
    %v210 = vtanh.pop %v209
    %v211 = vsub.f32 1.0, %v207
    %213 = vrot.lane.b32.xlu0 %v210, 64
    %v214 = vpop.permute.xlu0 %213
    %v216 = vmul.f32 %v211, %v214
    %v217 = vmul.f32 %v207, 0.0
    %v218 = vadd.f32 %v216, %v217
    %220 = vrot.lane.b32.xlu0 %v218, 64
    %v221 = vpop.permute.xlu0 %220
    %vm223 = vcmask 519168
    %224 = vst.msk [vmem:[#allocation2] sm:$0xf] %vm223, %v221
    %v225 = vsel %vm144, %v221, 0
    %227 = vmatpush.msra.mxu0 0.0
    %228 = vmatpush.msra.mxu0 0.0
    %229 = vmatpush.msra.mxu0 0.0
    %230 = vmatpush.msra.mxu0 0.0
    %231 = vmatpush.msra.mxu0 0.0
    %232 = vmatpush.msra.mxu0 0.0
    %233 = vmatpush.msra.mxu0 0.0
    %234 = vmatpush.msra.mxu0 0.0
    %235 = vmatpush.msra.mxu0 %v136
    %236 = vmatpush.msra.mxu0 %v134
    %237 = vmatpush.msra.mxu0 %v132
    %238 = vmatpush.msra.mxu0 %v130
    %239 = vmatpush.msra.mxu0 %v128
    %240 = vmatpush.msra.mxu0 %v126
    %241 = vmatpush.msra.mxu0 %v124
    %242 = vmatpush.msra.mxu0 %v122
    %243 = vmatmul.f32.gmra.mxu0 %v225
    %v244 = vpop.f32.mrf.mxu0
    %v245 = vadd.f32 %v140, %v244
    %246 = vdwg.mxu0
    %247 = vmatpush.msra.mxu0 0.0
    %248 = vmatpush.msra.mxu0 0.0
    %249 = vmatpush.msra.mxu0 0.0
    %250 = vmatpush.msra.mxu0 0.0
    %251 = vmatpush.msra.mxu0 0.0
    %252 = vmatpush.msra.mxu0 0.0
    %253 = vmatpush.msra.mxu0 0.0
    %254 = vmatpush.msra.mxu0 0.0
    %255 = vmatpush.msra.mxu0 %v137
    %256 = vmatpush.msra.mxu0 %v135
    %257 = vmatpush.msra.mxu0 %v133
    %258 = vmatpush.msra.mxu0 %v131
    %259 = vmatpush.msra.mxu0 %v129
    %260 = vmatpush.msra.mxu0 %v127
    %261 = vmatpush.msra.mxu0 %v125
    %262 = vmatpush.msra.mxu0 %v123
    %263 = vmatmul.f32.gmra.mxu0 %v225
    %v264 = vpop.f32.mrf.mxu0
    %v265 = vadd.f32 %v141, %v264
    %266 = vdwg.mxu0
    %v268 = vrot.slane %v245, 4
    %v270 = vadd.f32 %v82, %v268
    %v271 = vxor.u32 %v270, 2147483648
    %v272 = vmul.f32 %v271, 1.442695
    %v273 = vpow.pop %v272
    %v274 = vadd.f32 %v273, 1.0
    %v275 = vrcp.pop %v274
    %v276 = vmul.f32 %v274, %v275
    %v277 = vsub.f32 1.0, %v276
    %v278 = vmul.f32 %v275, %v277
    %v279 = vadd.f32 %v275, %v278
    %vm280 = vweird.f32 %v274
    %vm281 = vweird.f32 %v275
    %vm282 = vmor %vm280, %vm281
    %v283 = vsel %vm282, %v275, %v279
    %v284 = vand.u32 2147483647, %v274
    %vm285 = vcmp.eq.f32.partialorder %v284, 8.507059e+37
    %v286 = vand.u32 %v274, 2147483648
    %v287 = vor.u32 1.1754944e-38, %v286
    %v288 = vsel %vm285, %v287, %v283
    %v289 = vmul.f32 1.0, %v288
    %v291 = vrot.slane %v265, 4
    %v293 = vmul.f32 %v289, %v291
    %v294 = vadd.f32 %v111, %v293
    %v295 = vtanh.pop %v294
    %v296 = vsub.f32 1.0, %v289
    %298 = vrot.lane.b32.xlu0 %v295, 64
    %v299 = vpop.permute.xlu0 %298
    %v301 = vmul.f32 %v296, %v299
    %v302 = vrot.slane %v218, 4
    %v304 = vmul.f32 %v289, %v302
    %v305 = vadd.f32 %v301, %v304
    %307 = vrot.lane.b32.xlu0 %v305, 64
    %v308 = vpop.permute.xlu0 %307
    %vm310 = vcmask 523268
    %311 = vst.msk [vmem:[#allocation2] sm:$0xf0] %vm310, %v308
    %v312 = vrot.slane %v305, 4
    %313 = vrot.lane.b32.xlu0 %v312, 64
    %v314 = vpop.permute.xlu0 %313
    %v315 = vsel %vm144, %v314, 0
    %317 = vmatpush.msra.mxu0 0.0
    %318 = vmatpush.msra.mxu0 0.0
    %319 = vmatpush.msra.mxu0 0.0
    %320 = vmatpush.msra.mxu0 0.0
    %321 = vmatpush.msra.mxu0 0.0
    %322 = vmatpush.msra.mxu0 0.0
    %323 = vmatpush.msra.mxu0 0.0
    %324 = vmatpush.msra.mxu0 0.0
    %325 = vmatpush.msra.mxu0 %v136
    %326 = vmatpush.msra.mxu0 %v134
    %327 = vmatpush.msra.mxu0 %v132
    %328 = vmatpush.msra.mxu0 %v130
    %329 = vmatpush.msra.mxu0 %v128
    %330 = vmatpush.msra.mxu0 %v126
    %331 = vmatpush.msra.mxu0 %v124
    %332 = vmatpush.msra.mxu0 %v122
    %333 = vmatmul.f32.gmra.mxu0 %v315
    %v334 = vpop.f32.mrf.mxu0
    %v335 = vadd.f32 %v140, %v334
    %336 = vdwg.mxu0
    %337 = vmatpush.msra.mxu0 0.0
    %338 = vmatpush.msra.mxu0 0.0
    %339 = vmatpush.msra.mxu0 0.0
    %340 = vmatpush.msra.mxu0 0.0
    %341 = vmatpush.msra.mxu0 0.0
    %342 = vmatpush.msra.mxu0 0.0
    %343 = vmatpush.msra.mxu0 0.0
    %344 = vmatpush.msra.mxu0 0.0
    %345 = vmatpush.msra.mxu0 %v137
    %346 = vmatpush.msra.mxu0 %v135
    %347 = vmatpush.msra.mxu0 %v133
    %348 = vmatpush.msra.mxu0 %v131
    %349 = vmatpush.msra.mxu0 %v129
    %350 = vmatpush.msra.mxu0 %v127
    %351 = vmatpush.msra.mxu0 %v125
    %352 = vmatpush.msra.mxu0 %v123
    %353 = vmatmul.f32.gmra.mxu0 %v315
    %v354 = vpop.f32.mrf.mxu0
    %v355 = vadd.f32 %v141, %v354
    %356 = vdwg.mxu0
    %v357 = vadd.f32 %v85, %v335
    %v358 = vxor.u32 %v357, 2147483648
    %v359 = vmul.f32 %v358, 1.442695
    %v360 = vpow.pop %v359
    %v361 = vadd.f32 %v360, 1.0
    %v362 = vrcp.pop %v361
    %v363 = vmul.f32 %v361, %v362
    %v364 = vsub.f32 1.0, %v363
    %v365 = vmul.f32 %v362, %v364
    %v366 = vadd.f32 %v362, %v365
    %vm367 = vweird.f32 %v361
    %vm368 = vweird.f32 %v362
    %vm369 = vmor %vm367, %vm368
    %v370 = vsel %vm369, %v362, %v366
    %v371 = vand.u32 2147483647, %v361
    %vm372 = vcmp.eq.f32.partialorder %v371, 8.507059e+37
    %v373 = vand.u32 %v361, 2147483648
    %v374 = vor.u32 1.1754944e-38, %v373
    %v375 = vsel %vm372, %v374, %v370
    %v376 = vmul.f32 1.0, %v375
    %v377 = vmul.f32 %v376, %v355
    %v378 = vadd.f32 %v114, %v377
    %v379 = vtanh.pop %v378
    %v380 = vsub.f32 1.0, %v376
    %382 = vrot.lane.b32.xlu0 %v379, 64
    %v383 = vpop.permute.xlu0 %382
    %v385 = vmul.f32 %v380, %v383
    %v387 = vmul.f32 %v376, %v312
    %v388 = vadd.f32 %v385, %v387
    %390 = vrot.lane.b32.xlu0 %v388, 64
    %v391 = vpop.permute.xlu0 %390
    %393 = vst.msk [vmem:[#allocation2 + $0x8] sm:$0xf] %vm223, %v391
    %v394 = vsel %vm144, %v391, 0
    %396 = vmatpush.msra.mxu0 0.0
    %397 = vmatpush.msra.mxu0 0.0
    %398 = vmatpush.msra.mxu0 0.0
    %399 = vmatpush.msra.mxu0 0.0
    %400 = vmatpush.msra.mxu0 0.0
    %401 = vmatpush.msra.mxu0 0.0
    %402 = vmatpush.msra.mxu0 0.0
    %403 = vmatpush.msra.mxu0 0.0
    %404 = vmatpush.msra.mxu0 %v136
    %405 = vmatpush.msra.mxu0 %v134
    %406 = vmatpush.msra.mxu0 %v132
    %407 = vmatpush.msra.mxu0 %v130
    %408 = vmatpush.msra.mxu0 %v128
    %409 = vmatpush.msra.mxu0 %v126
    %410 = vmatpush.msra.mxu0 %v124
    %411 = vmatpush.msra.mxu0 %v122
    %412 = vmatmul.f32.gmra.mxu0 %v394
    %v413 = vpop.f32.mrf.mxu0
    %v414 = vadd.f32 %v140, %v413
    %415 = vdwg.mxu0
    %416 = vmatpush.msra.mxu0 0.0
    %417 = vmatpush.msra.mxu0 0.0
    %418 = vmatpush.msra.mxu0 0.0
    %419 = vmatpush.msra.mxu0 0.0
    %420 = vmatpush.msra.mxu0 0.0
    %421 = vmatpush.msra.mxu0 0.0
    %422 = vmatpush.msra.mxu0 0.0
    %423 = vmatpush.msra.mxu0 0.0
    %424 = vmatpush.msra.mxu0 %v137
    %425 = vmatpush.msra.mxu0 %v135
    %426 = vmatpush.msra.mxu0 %v133
    %427 = vmatpush.msra.mxu0 %v131
    %428 = vmatpush.msra.mxu0 %v129
    %429 = vmatpush.msra.mxu0 %v127
    %430 = vmatpush.msra.mxu0 %v125
    %431 = vmatpush.msra.mxu0 %v123
    %432 = vmatmul.f32.gmra.mxu0 %v394
    %v433 = vpop.f32.mrf.mxu0
    %v434 = vadd.f32 %v141, %v433
    %435 = vdwg.mxu0
    %v437 = vrot.slane %v414, 4
    %v439 = vadd.f32 %v85, %v437
    %v440 = vxor.u32 %v439, 2147483648
    %v441 = vmul.f32 %v440, 1.442695
    %v442 = vpow.pop %v441
    %v443 = vadd.f32 %v442, 1.0
    %v444 = vrcp.pop %v443
    %v445 = vmul.f32 %v443, %v444
    %v446 = vsub.f32 1.0, %v445
    %v447 = vmul.f32 %v444, %v446
    %v448 = vadd.f32 %v444, %v447
    %vm449 = vweird.f32 %v443
    %vm450 = vweird.f32 %v444
    %vm451 = vmor %vm449, %vm450
    %v452 = vsel %vm451, %v444, %v448
    %v453 = vand.u32 2147483647, %v443
    %vm454 = vcmp.eq.f32.partialorder %v453, 8.507059e+37
    %v455 = vand.u32 %v443, 2147483648
    %v456 = vor.u32 1.1754944e-38, %v455
    %v457 = vsel %vm454, %v456, %v452
    %v458 = vmul.f32 1.0, %v457
    %v460 = vrot.slane %v434, 4
    %v462 = vmul.f32 %v458, %v460
    %v463 = vadd.f32 %v114, %v462
    %v464 = vtanh.pop %v463
    %v465 = vsub.f32 1.0, %v458
    %467 = vrot.lane.b32.xlu0 %v464, 64
    %v468 = vpop.permute.xlu0 %467
    %v470 = vmul.f32 %v465, %v468
    %v471 = vrot.slane %v388, 4
    %v473 = vmul.f32 %v458, %v471
    %v474 = vadd.f32 %v470, %v473
    %476 = vrot.lane.b32.xlu0 %v474, 64
    %v477 = vpop.permute.xlu0 %476
    %479 = vst.msk [vmem:[#allocation2 + $0x8] sm:$0xf0] %vm310, %v477
    %v480 = vrot.slane %v474, 4
    %481 = vrot.lane.b32.xlu0 %v480, 64
    %v482 = vpop.permute.xlu0 %481
    %v483 = vsel %vm144, %v482, 0
    %485 = vmatpush.msra.mxu0 0.0
    %486 = vmatpush.msra.mxu0 0.0
    %487 = vmatpush.msra.mxu0 0.0
    %488 = vmatpush.msra.mxu0 0.0
    %489 = vmatpush.msra.mxu0 0.0
    %490 = vmatpush.msra.mxu0 0.0
    %491 = vmatpush.msra.mxu0 0.0
    %492 = vmatpush.msra.mxu0 0.0
    %493 = vmatpush.msra.mxu0 %v136
    %494 = vmatpush.msra.mxu0 %v134
    %495 = vmatpush.msra.mxu0 %v132
    %496 = vmatpush.msra.mxu0 %v130
    %497 = vmatpush.msra.mxu0 %v128
    %498 = vmatpush.msra.mxu0 %v126
    %499 = vmatpush.msra.mxu0 %v124
    %500 = vmatpush.msra.mxu0 %v122
    %501 = vmatmul.f32.gmra.mxu0 %v483
    %v502 = vpop.f32.mrf.mxu0
    %v503 = vadd.f32 %v140, %v502
    %504 = vdwg.mxu0
    %505 = vmatpush.msra.mxu0 0.0
    %506 = vmatpush.msra.mxu0 0.0
    %507 = vmatpush.msra.mxu0 0.0
    %508 = vmatpush.msra.mxu0 0.0
    %509 = vmatpush.msra.mxu0 0.0
    %510 = vmatpush.msra.mxu0 0.0
    %511 = vmatpush.msra.mxu0 0.0
    %512 = vmatpush.msra.mxu0 0.0
    %513 = vmatpush.msra.mxu0 %v137
    %514 = vmatpush.msra.mxu0 %v135
    %515 = vmatpush.msra.mxu0 %v133
    %516 = vmatpush.msra.mxu0 %v131
    %517 = vmatpush.msra.mxu0 %v129
    %518 = vmatpush.msra.mxu0 %v127
    %519 = vmatpush.msra.mxu0 %v125
    %520 = vmatpush.msra.mxu0 %v123
    %521 = vmatmul.f32.gmra.mxu0 %v483
    %v522 = vpop.f32.mrf.mxu0
    %v523 = vadd.f32 %v141, %v522
    %524 = vdwg.mxu0
    %v525 = vadd.f32 %v88, %v503
    %v526 = vxor.u32 %v525, 2147483648
    %v527 = vmul.f32 %v526, 1.442695
    %v528 = vpow.pop %v527
    %v529 = vadd.f32 %v528, 1.0
    %v530 = vrcp.pop %v529
    %v531 = vmul.f32 %v529, %v530
    %v532 = vsub.f32 1.0, %v531
    %v533 = vmul.f32 %v530, %v532
    %v534 = vadd.f32 %v530, %v533
    %vm535 = vweird.f32 %v529
    %vm536 = vweird.f32 %v530
    %vm537 = vmor %vm535, %vm536
    %v538 = vsel %vm537, %v530, %v534
    %v539 = vand.u32 2147483647, %v529
    %vm540 = vcmp.eq.f32.partialorder %v539, 8.507059e+37
    %v541 = vand.u32 %v529, 2147483648
    %v542 = vor.u32 1.1754944e-38, %v541
    %v543 = vsel %vm540, %v542, %v538
    %v544 = vmul.f32 1.0, %v543
    %v545 = vmul.f32 %v544, %v523
    %v546 = vadd.f32 %v117, %v545
    %v547 = vtanh.pop %v546
    %v548 = vsub.f32 1.0, %v544
    %550 = vrot.lane.b32.xlu0 %v547, 64
    %v551 = vpop.permute.xlu0 %550
    %v553 = vmul.f32 %v548, %v551
    %v555 = vmul.f32 %v544, %v480
    %v556 = vadd.f32 %v553, %v555
    %558 = vrot.lane.b32.xlu0 %v556, 64
    %v559 = vpop.permute.xlu0 %558
    %561 = vst.msk [vmem:[#allocation2 + $0x10] sm:$0xf] %vm223, %v559
    %v562 = vsel %vm144, %v559, 0
    %564 = vmatpush.msra.mxu0 0.0
    %565 = vmatpush.msra.mxu0 0.0
    %566 = vmatpush.msra.mxu0 0.0
    %567 = vmatpush.msra.mxu0 0.0
    %568 = vmatpush.msra.mxu0 0.0
    %569 = vmatpush.msra.mxu0 0.0
    %570 = vmatpush.msra.mxu0 0.0
    %571 = vmatpush.msra.mxu0 0.0
    %572 = vmatpush.msra.mxu0 %v136
    %573 = vmatpush.msra.mxu0 %v134
    %574 = vmatpush.msra.mxu0 %v132
    %575 = vmatpush.msra.mxu0 %v130
    %576 = vmatpush.msra.mxu0 %v128
    %577 = vmatpush.msra.mxu0 %v126
    %578 = vmatpush.msra.mxu0 %v124
    %579 = vmatpush.msra.mxu0 %v122
    %580 = vmatmul.f32.gmra.mxu0 %v562
    %v581 = vpop.f32.mrf.mxu0
    %v582 = vadd.f32 %v140, %v581
    %583 = vdwg.mxu0
    %584 = vmatpush.msra.mxu0 0.0
    %585 = vmatpush.msra.mxu0 0.0
    %586 = vmatpush.msra.mxu0 0.0
    %587 = vmatpush.msra.mxu0 0.0
    %588 = vmatpush.msra.mxu0 0.0
    %589 = vmatpush.msra.mxu0 0.0
    %590 = vmatpush.msra.mxu0 0.0
    %591 = vmatpush.msra.mxu0 0.0
    %592 = vmatpush.msra.mxu0 %v137
    %593 = vmatpush.msra.mxu0 %v135
    %594 = vmatpush.msra.mxu0 %v133
    %595 = vmatpush.msra.mxu0 %v131
    %596 = vmatpush.msra.mxu0 %v129
    %597 = vmatpush.msra.mxu0 %v127
    %598 = vmatpush.msra.mxu0 %v125
    %599 = vmatpush.msra.mxu0 %v123
    %600 = vmatmul.f32.gmra.mxu0 %v562
    %v601 = vpop.f32.mrf.mxu0
    %v602 = vadd.f32 %v141, %v601
    %603 = vdwg.mxu0
    %v605 = vrot.slane %v582, 4
    %v607 = vadd.f32 %v88, %v605
    %v608 = vxor.u32 %v607, 2147483648
    %v609 = vmul.f32 %v608, 1.442695
    %v610 = vpow.pop %v609
    %v611 = vadd.f32 %v610, 1.0
    %v612 = vrcp.pop %v611
    %v613 = vmul.f32 %v611, %v612
    %v614 = vsub.f32 1.0, %v613
    %v615 = vmul.f32 %v612, %v614
    %v616 = vadd.f32 %v612, %v615
    %vm617 = vweird.f32 %v611
    %vm618 = vweird.f32 %v612
    %vm619 = vmor %vm617, %vm618
    %v620 = vsel %vm619, %v612, %v616
    %v621 = vand.u32 2147483647, %v611
    %vm622 = vcmp.eq.f32.partialorder %v621, 8.507059e+37
    %v623 = vand.u32 %v611, 2147483648
    %v624 = vor.u32 1.1754944e-38, %v623
    %v625 = vsel %vm622, %v624, %v620
    %v626 = vmul.f32 1.0, %v625
    %v628 = vrot.slane %v602, 4
    %v630 = vmul.f32 %v626, %v628
    %v631 = vadd.f32 %v117, %v630
    %v632 = vtanh.pop %v631
    %v633 = vsub.f32 1.0, %v626
    %635 = vrot.lane.b32.xlu0 %v632, 64
    %v636 = vpop.permute.xlu0 %635
    %v638 = vmul.f32 %v633, %v636
    %v639 = vrot.slane %v556, 4
    %v641 = vmul.f32 %v626, %v639
    %v642 = vadd.f32 %v638, %v641
    %644 = vrot.lane.b32.xlu0 %v642, 64
    %v645 = vpop.permute.xlu0 %644
    %647 = vst.msk [vmem:[#allocation2 + $0x10] sm:$0xf0] %vm310, %v645
    %v648 = vrot.slane %v642, 4
    %649 = vrot.lane.b32.xlu0 %v648, 64
    %v650 = vpop.permute.xlu0 %649
    %v651 = vsel %vm144, %v650, 0
    %653 = vmatpush.msra.mxu0 0.0
    %654 = vmatpush.msra.mxu0 0.0
    %655 = vmatpush.msra.mxu0 0.0
    %656 = vmatpush.msra.mxu0 0.0
    %657 = vmatpush.msra.mxu0 0.0
    %658 = vmatpush.msra.mxu0 0.0
    %659 = vmatpush.msra.mxu0 0.0
    %660 = vmatpush.msra.mxu0 0.0
    %661 = vmatpush.msra.mxu0 %v136
    %662 = vmatpush.msra.mxu0 %v134
    %663 = vmatpush.msra.mxu0 %v132
    %664 = vmatpush.msra.mxu0 %v130
    %665 = vmatpush.msra.mxu0 %v128
    %666 = vmatpush.msra.mxu0 %v126
    %667 = vmatpush.msra.mxu0 %v124
    %668 = vmatpush.msra.mxu0 %v122
    %669 = vmatmul.f32.gmra.mxu0 %v651
    %v670 = vpop.f32.mrf.mxu0
    %v671 = vadd.f32 %v140, %v670
    %672 = vdwg.mxu0
    %673 = vmatpush.msra.mxu0 0.0
    %674 = vmatpush.msra.mxu0 0.0
    %675 = vmatpush.msra.mxu0 0.0
    %676 = vmatpush.msra.mxu0 0.0
    %677 = vmatpush.msra.mxu0 0.0
    %678 = vmatpush.msra.mxu0 0.0
    %679 = vmatpush.msra.mxu0 0.0
    %680 = vmatpush.msra.mxu0 0.0
    %681 = vmatpush.msra.mxu0 %v137
    %682 = vmatpush.msra.mxu0 %v135
    %683 = vmatpush.msra.mxu0 %v133
    %684 = vmatpush.msra.mxu0 %v131
    %685 = vmatpush.msra.mxu0 %v129
    %686 = vmatpush.msra.mxu0 %v127
    %687 = vmatpush.msra.mxu0 %v125
    %688 = vmatpush.msra.mxu0 %v123
    %689 = vmatmul.f32.gmra.mxu0 %v651
    %v690 = vpop.f32.mrf.mxu0
    %v691 = vadd.f32 %v141, %v690
    %692 = vdwg.mxu0
    %v693 = vadd.f32 %v91, %v671
    %v694 = vxor.u32 %v693, 2147483648
    %v695 = vmul.f32 %v694, 1.442695
    %v696 = vpow.pop %v695
    %v697 = vadd.f32 %v696, 1.0
    %v698 = vrcp.pop %v697
    %v699 = vmul.f32 %v697, %v698
    %v700 = vsub.f32 1.0, %v699
    %v701 = vmul.f32 %v698, %v700
    %v702 = vadd.f32 %v698, %v701
    %vm703 = vweird.f32 %v697
    %vm704 = vweird.f32 %v698
    %vm705 = vmor %vm703, %vm704
    %v706 = vsel %vm705, %v698, %v702
    %v707 = vand.u32 2147483647, %v697
    %vm708 = vcmp.eq.f32.partialorder %v707, 8.507059e+37
    %v709 = vand.u32 %v697, 2147483648
    %v710 = vor.u32 1.1754944e-38, %v709
    %v711 = vsel %vm708, %v710, %v706
    %v712 = vmul.f32 1.0, %v711
    %v713 = vmul.f32 %v712, %v691
    %v714 = vadd.f32 %v120, %v713
    %v715 = vtanh.pop %v714
    %v716 = vsub.f32 1.0, %v712
    %718 = vrot.lane.b32.xlu0 %v715, 64
    %v719 = vpop.permute.xlu0 %718
    %v721 = vmul.f32 %v716, %v719
    %v723 = vmul.f32 %v712, %v648
    %v724 = vadd.f32 %v721, %v723
    %726 = vrot.lane.b32.xlu0 %v724, 64
    %v727 = vpop.permute.xlu0 %726
    %729 = vst.msk [vmem:[#allocation2 + $0x18] sm:$0xf] %vm223, %v727
    %v730 = vsel %vm144, %v727, 0
    %732 = vmatpush.msra.mxu0 0.0
    %733 = vmatpush.msra.mxu0 0.0
    %734 = vmatpush.msra.mxu0 0.0
    %735 = vmatpush.msra.mxu0 0.0
    %736 = vmatpush.msra.mxu0 0.0
    %737 = vmatpush.msra.mxu0 0.0
    %738 = vmatpush.msra.mxu0 0.0
    %739 = vmatpush.msra.mxu0 0.0
    %740 = vmatpush.msra.mxu0 %v136
    %741 = vmatpush.msra.mxu0 %v134
    %742 = vmatpush.msra.mxu0 %v132
    %743 = vmatpush.msra.mxu0 %v130
    %744 = vmatpush.msra.mxu0 %v128
    %745 = vmatpush.msra.mxu0 %v126
    %746 = vmatpush.msra.mxu0 %v124
    %747 = vmatpush.msra.mxu0 %v122
    %748 = vmatmul.f32.gmra.mxu0 %v730
    %v749 = vpop.f32.mrf.mxu0
    %v750 = vadd.f32 %v140, %v749
    %751 = vdwg.mxu0
    %752 = vmatpush.msra.mxu0 0.0
    %753 = vmatpush.msra.mxu0 0.0
    %754 = vmatpush.msra.mxu0 0.0
    %755 = vmatpush.msra.mxu0 0.0
    %756 = vmatpush.msra.mxu0 0.0
    %757 = vmatpush.msra.mxu0 0.0
    %758 = vmatpush.msra.mxu0 0.0
    %759 = vmatpush.msra.mxu0 0.0
    %760 = vmatpush.msra.mxu0 %v137
    %761 = vmatpush.msra.mxu0 %v135
    %762 = vmatpush.msra.mxu0 %v133
    %763 = vmatpush.msra.mxu0 %v131
    %764 = vmatpush.msra.mxu0 %v129
    %765 = vmatpush.msra.mxu0 %v127
    %766 = vmatpush.msra.mxu0 %v125
    %767 = vmatpush.msra.mxu0 %v123
    %768 = vmatmul.f32.gmra.mxu0 %v730
    %v769 = vpop.f32.mrf.mxu0
    %v770 = vadd.f32 %v141, %v769
    %771 = vdwg.mxu0
    %v773 = vrot.slane %v750, 4
    %v775 = vadd.f32 %v91, %v773
    %v776 = vxor.u32 %v775, 2147483648
    %v777 = vmul.f32 %v776, 1.442695
    %v778 = vpow.pop %v777
    %v779 = vadd.f32 %v778, 1.0
    %v780 = vrcp.pop %v779
    %v781 = vmul.f32 %v779, %v780
    %v782 = vsub.f32 1.0, %v781
    %v783 = vmul.f32 %v780, %v782
    %v784 = vadd.f32 %v780, %v783
    %vm785 = vweird.f32 %v779
    %vm786 = vweird.f32 %v780
    %vm787 = vmor %vm785, %vm786
    %v788 = vsel %vm787, %v780, %v784
    %v789 = vand.u32 2147483647, %v779
    %vm790 = vcmp.eq.f32.partialorder %v789, 8.507059e+37
    %v791 = vand.u32 %v779, 2147483648
    %v792 = vor.u32 1.1754944e-38, %v791
    %v793 = vsel %vm790, %v792, %v788
    %v794 = vmul.f32 1.0, %v793
    %v796 = vrot.slane %v770, 4
    %v798 = vmul.f32 %v794, %v796
    %v799 = vadd.f32 %v120, %v798
    %v800 = vtanh.pop %v799
    %v801 = vsub.f32 1.0, %v794
    %803 = vrot.lane.b32.xlu0 %v800, 64
    %v804 = vpop.permute.xlu0 %803
    %v806 = vmul.f32 %v801, %v804
    %v807 = vrot.slane %v724, 4
    %v809 = vmul.f32 %v794, %v807
    %v810 = vadd.f32 %v806, %v809
    %812 = vrot.lane.b32.xlu0 %v810, 64
    %v813 = vpop.permute.xlu0 %812
    %815 = vst.msk [vmem:[#allocation2 + $0x18] sm:$0xf0] %vm310, %v813
    %v816 = vld [vmem:[#allocation2] sm:$0xff]
    %v817 = vld [vmem:[#allocation2 + $0x8] sm:$0xff]
    %v818 = vld [vmem:[#allocation2 + $0x10] sm:$0xff]
    %v819 = vld [vmem:[#allocation2 + $0x18] sm:$0xff]
    %v820 = vld [vmem:[%s5] sm:$0xff]
    %v821 = vld [vmem:[%s5 + $0x8] sm:$0xff]
    %v822 = vld [vmem:[%s5 + $0x10] sm:$0xff]
    %v823 = vld [vmem:[%s5 + $0x18] sm:$0xff]
    %v824 = vld [vmem:[%s5 + $0x20] sm:$0xff]
    %v825 = vld [vmem:[%s5 + $0x28] sm:$0xff]
    %v826 = vld [vmem:[%s5 + $0x30] sm:$0xff]
    %v827 = vld [vmem:[%s5 + $0x38] sm:$0xff]
    %v829 = vsel %vm144, %v816, 0
    %v832 = vsel %vm144, %v817, 0
    %v835 = vsel %vm144, %v818, 0
    %v838 = vsel %vm144, %v819, 0
    %840 = vmatpush.msra.mxu0 0.0
    %841 = vmatpush.msra.mxu0 0.0
    %842 = vmatpush.msra.mxu0 0.0
    %843 = vmatpush.msra.mxu0 0.0
    %844 = vmatpush.msra.mxu0 0.0
    %845 = vmatpush.msra.mxu0 0.0
    %846 = vmatpush.msra.mxu0 0.0
    %847 = vmatpush.msra.mxu0 0.0
    %848 = vmatpush.msra.mxu0 %v827
    %849 = vmatpush.msra.mxu0 %v826
    %850 = vmatpush.msra.mxu0 %v825
    %851 = vmatpush.msra.mxu0 %v824
    %852 = vmatpush.msra.mxu0 %v823
    %853 = vmatpush.msra.mxu0 %v822
    %854 = vmatpush.msra.mxu0 %v821
    %855 = vmatpush.msra.mxu0 %v820
    %856 = vmatmul.f32.gmra.mxu0 %v829
    %v857 = vpop.f32.mrf.mxu0
    %v858 = vadd.f32 0.0, %v857
    %859 = vmatmul.f32.gmra.mxu0 %v832
    %v860 = vpop.f32.mrf.mxu0
    %v861 = vadd.f32 0.0, %v860
    %862 = vmatmul.f32.gmra.mxu0 %v835
    %v863 = vpop.f32.mrf.mxu0
    %v864 = vadd.f32 0.0, %v863
    %865 = vmatmul.f32.gmra.mxu0 %v838
    %v866 = vpop.f32.mrf.mxu0
    %v867 = vadd.f32 0.0, %v866
    %868 = vdwg.mxu0
    %v869 = vld [vmem:[%s6] sm:$0x1]
    %v871 = vrot.slane %v867, 4
    %872 = vrot.lane.b32.xlu0 %v871, 64
    %v873 = vpop.permute.xlu0 %872
    %v875 = vadd.f32 %v858, %v873
    %v877 = vrot.slane %v875, 1
    %878 = vrot.lane.b32.xlu0 %v877, 96
    %v879 = vpop.permute.xlu0 %878
    %v881 = vadd.f32 %v875, %v879
    %v883 = vperm.slane %v869, 0
    %v885 = vadd.f32 %v881, %v883
    %vm886 = vcmask 256000
    %v887 = vsel %vm886, %v885, -inf
    %v888 = vrot.slane %v887, 4
    %v889 = vmax.f32 %v887, %v888
    %v890 = vrot.slane %v889, 2
    %v891 = vmax.f32 %v889, %v890
    %v892 = vrot.slane %v891, 1
    %v893 = vmax.f32 %v891, %v892
    %v894 = vmax.f32 %v893, 0.0
    %vm895 = vcmask 260100
    %v896 = vsel %vm895, %v885, -inf
    %v897 = vrot.slane %v896, 4
    %v898 = vmax.f32 %v896, %v897
    %v899 = vrot.slane %v898, 2
    %v900 = vmax.f32 %v898, %v899
    %v901 = vrot.slane %v900, 1
    %v902 = vmax.f32 %v900, %v901
    %v903 = vmax.f32 %v902, 0.0
    %v905 = vrot.slane %v864, 4
    %906 = vrot.lane.b32.xlu0 %v905, 64
    %v907 = vpop.permute.xlu0 %906
    %v909 = vadd.f32 %v861, %v907
    %v911 = vrot.slane %v909, 1
    %912 = vrot.lane.b32.xlu0 %v911, 96
    %v913 = vpop.permute.xlu0 %912
    %v915 = vadd.f32 %v909, %v913
    %v916 = vadd.f32 %v915, %v883
    %v917 = vsel %vm886, %v916, -inf
    %v918 = vrot.slane %v917, 4
    %v919 = vmax.f32 %v917, %v918
    %v920 = vrot.slane %v919, 2
    %v921 = vmax.f32 %v919, %v920
    %v922 = vrot.slane %v921, 1
    %v923 = vmax.f32 %v921, %v922
    %v924 = vmax.f32 %v923, 0.0
    %v925 = vsel %vm895, %v916, -inf
    %v926 = vrot.slane %v925, 4
    %v927 = vmax.f32 %v925, %v926
    %v928 = vrot.slane %v927, 2
    %v929 = vmax.f32 %v927, %v928
    %v930 = vrot.slane %v929, 1
    %v931 = vmax.f32 %v929, %v930
    %v932 = vmax.f32 %v931, 0.0
    %v934 = vrot.slane %v861, 4
    %935 = vrot.lane.b32.xlu0 %v934, 64
    %v936 = vpop.permute.xlu0 %935
    %v938 = vadd.f32 %v864, %v936
    %v940 = vrot.slane %v938, 1
    %941 = vrot.lane.b32.xlu0 %v940, 96
    %v942 = vpop.permute.xlu0 %941
    %v944 = vadd.f32 %v938, %v942
    %v945 = vadd.f32 %v944, %v883
    %v946 = vsel %vm886, %v945, -inf
    %v947 = vrot.slane %v946, 4
    %v948 = vmax.f32 %v946, %v947
    %v949 = vrot.slane %v948, 2
    %v950 = vmax.f32 %v948, %v949
    %v951 = vrot.slane %v950, 1
    %v952 = vmax.f32 %v950, %v951
    %v953 = vmax.f32 %v952, 0.0
    %v954 = vsel %vm895, %v945, -inf
    %v955 = vrot.slane %v954, 4
    %v956 = vmax.f32 %v954, %v955
    %v957 = vrot.slane %v956, 2
    %v958 = vmax.f32 %v956, %v957
    %v959 = vrot.slane %v958, 1
    %v960 = vmax.f32 %v958, %v959
    %v961 = vmax.f32 %v960, 0.0
    %v963 = vrot.slane %v858, 4
    %964 = vrot.lane.b32.xlu0 %v963, 64
    %v965 = vpop.permute.xlu0 %964
    %v967 = vadd.f32 %v867, %v965
    %v969 = vrot.slane %v967, 1
    %970 = vrot.lane.b32.xlu0 %v969, 96
    %v971 = vpop.permute.xlu0 %970
    %v973 = vadd.f32 %v967, %v971
    %v974 = vadd.f32 %v973, %v883
    %v975 = vsel %vm886, %v974, -inf
    %v976 = vrot.slane %v975, 4
    %v977 = vmax.f32 %v975, %v976
    %v978 = vrot.slane %v977, 2
    %v979 = vmax.f32 %v977, %v978
    %v980 = vrot.slane %v979, 1
    %v981 = vmax.f32 %v979, %v980
    %v982 = vmax.f32 %v981, 0.0
    %v983 = vsel %vm895, %v974, -inf
    %v984 = vrot.slane %v983, 4
    %v985 = vmax.f32 %v983, %v984
    %v986 = vrot.slane %v985, 2
    %v987 = vmax.f32 %v985, %v986
    %v988 = vrot.slane %v987, 1
    %v989 = vmax.f32 %v987, %v988
    %v990 = vmax.f32 %v989, 0.0
    %vm991 = vcmask 1040384
    %v992 = vsel %vm991, %v894, %v903
    %vm993 = vcmask 1041408
    %v994 = vsel %vm993, %v992, %v924
    %vm995 = vcmask 1042432
    %v996 = vsel %vm995, %v994, %v932
    %vm997 = vcmask 1043456
    %v998 = vsel %vm997, %v996, %v953
    %vm999 = vcmask 1044480
    %v1000 = vsel %vm999, %v998, %v961
    %vm1001 = vcmask 1045504
    %v1002 = vsel %vm1001, %v1000, %v982
    %vm1003 = vcmask 1046528
    %v1004 = vsel %vm1003, %v1002, %v990
    %v1005 = vld [vmem:[%s7] sm:$0xff]
    %v1006 = vld [vmem:[%s7 + $0x8] sm:$0xff]
    %v1007 = vld [vmem:[%s7 + $0x10] sm:$0xff]
    %v1008 = vld [vmem:[%s7 + $0x18] sm:$0xff]
    %v1009 = vld [vmem:[%s8] sm:$0x1]
    %v1011 = vperm.slane %v1009, 0
    %v1014 = vsel %vm51, %v1004, 0
    %1016 = vmatpush.msra.mxu0 0.0
    %1017 = vmatpush.msra.mxu0 0.0
    %1018 = vmatpush.msra.mxu0 0.0
    %1019 = vmatpush.msra.mxu0 0.0
    %1020 = vmatpush.msra.mxu0 0.0
    %1021 = vmatpush.msra.mxu0 0.0
    %1022 = vmatpush.msra.mxu0 0.0
    %1023 = vmatpush.msra.mxu0 0.0
    %1024 = vmatpush.msra.mxu0 0.0
    %1025 = vmatpush.msra.mxu0 0.0
    %1026 = vmatpush.msra.mxu0 0.0
    %1027 = vmatpush.msra.mxu0 0.0
    %1028 = vmatpush.msra.mxu0 %v1008
    %1029 = vmatpush.msra.mxu0 %v1007
    %1030 = vmatpush.msra.mxu0 %v1006
    %1031 = vmatpush.msra.mxu0 %v1005
    %1032 = vmatmul.f32.gmra.mxu0 %v1014
    %v1033 = vpop.f32.mrf.mxu0
    %v1034 = vadd.f32 %v1011, %v1033
    %1035 = vdwg.mxu0
    %vm1036 = vcmask 39936
    %1037 = vst.msk [vmem:[#allocation3] sm:$0xff] %vm1036, %v1034
    // Predicated region
    $region38: #{_gru_cnn_forward_impl.1} parent=1 // pred_check
      _
    $region39: #{_gru_cnn_forward_impl.1} parent=1 // pred_check_branch
      %1039 = sbr.rel (0) target = $region41
    $region40: #{_gru_cnn_forward_impl.1} parent=1 // pred_region
      %1041 = vsyncadd [#allocation4], 0
      %s1043 = sshll.u32 [#allocation3], 4
      %s1044 = int_to_ptr.vmem [resolvable:$true] %s1043
      %s1045 = sshll.u32 %s9, 4
      %s1046 = int_to_ptr.hbm [resolvable:$true] %s1045
      %1048 = dma.vmem_to_hbm [thread:$0]  %s1044, 128, %s1046, [#allocation4]
    $region41: #{_gru_cnn_forward_impl.1} parent=1 // pred_fallthru
      _
    // Predicated region
    $region42: #{_gru_cnn_forward_impl.1} parent=1 // pred_check
      _
    $region43: #{_gru_cnn_forward_impl.1} parent=1 // pred_check_branch
      %1050 = sbr.rel (0) target = $region45
    $region44: #{_gru_cnn_forward_impl.1} parent=1 // pred_region
      %1052 = dma.done [#allocation4], 128
    $region45: #{_gru_cnn_forward_impl.1} parent=1 // pred_fallthru
      _
    %1053 = vsyncpa [#allocation4], 1

</llo_original>
